<compile_context>
chip_gen: v6e
topology: v6e:2x2x1
jax: 0.10.0
libtpu: 0.0.40
codegen_flags: <defaults>
</compile_context>

<pallas_src>
import jax
import jax.numpy as jnp
import numpy as np
from jax import lax
from jax.experimental import pallas as pl
from jax.experimental.pallas import tpu as pltpu


# ---------------------------------------------------------------------------
# Fused Pallas kernel: all LSTM layers + FC head, everything resident in VMEM
# ---------------------------------------------------------------------------
def _make_fused_lstm_fc_kernel(num_layers, T, B, H):
    def kernel(*refs):
        x_ref = refs[0]                               # (T*B, D_in) time-major rows
        layer_refs = refs[1:1 + 3 * num_layers]       # per layer: w_ih, w_hh, bias
        w_fc_ref = refs[1 + 3 * num_layers]           # (H, 1)
        b_fc_ref = refs[2 + 3 * num_layers]           # (1, 1)
        out_ref = refs[3 + 3 * num_layers]            # (B, 1)
        hseq_sc = refs[4 + 3 * num_layers]            # VMEM scratch (T*B, H)

        src = x_ref[...]                              # layer-0 input, (T*B, D)
        h = jnp.zeros((B, H), jnp.float32)
        for l in range(num_layers):
            w_ih = layer_refs[3 * l][...]             # (D_in, 4H)
            w_hh = layer_refs[3 * l + 1][...]         # (H, 4H)  hoisted out of time loop
            bias = layer_refs[3 * l + 2][...]         # (1, 4H)  b_ih + b_hh

            # One batched input projection for the whole sequence (+ fused bias).
            gx = jnp.dot(src, w_ih, preferred_element_type=jnp.float32) + bias  # (T*B, 4H)

            h = jnp.zeros((B, H), jnp.float32)
            c = jnp.zeros((B, H), jnp.float32)
            last = (l == num_layers - 1)
            # Fully-unrolled recurrence: only the (B,H)@(H,4H) dot is serial.
            for t in range(T):
                gates = gx[t * B:(t + 1) * B, :] + jnp.dot(
                    h, w_hh, preferred_element_type=jnp.float32)        # (B, 4H)
                i_g = jax.nn.sigmoid(gates[:, 0 * H:1 * H])
                f_g = jax.nn.sigmoid(gates[:, 1 * H:2 * H])
                g_g = jnp.tanh(gates[:, 2 * H:3 * H])
                o_g = jax.nn.sigmoid(gates[:, 3 * H:4 * H])
                c = f_g * c + i_g * g_g
                h = o_g * jnp.tanh(c)
                if not last:
                    hseq_sc[t * B:(t + 1) * B, :] = h   # feeds next layer; stays in VMEM
            if not last:
                src = hseq_sc[...]                       # (T*B, H)
            # (eval mode: inter-layer dropout is identity)

        # Fused Linear head on the final timestep's hidden state of the last layer.
        out_ref[...] = (
            jnp.dot(h, w_fc_ref[...], preferred_element_type=jnp.float32)
            + b_fc_ref[...]
        ).astype(out_ref.dtype)

    return kernel


# ---------------------------------------------------------------------------
# Wrapper
# ---------------------------------------------------------------------------
@jax.jit
def lstm_forward(x, params):
    """x: (B, T, input_size) -> (B, 1), matching the PyTorch module forward."""
    B, T, D = x.shape
    H = params["layers"][0]["w_hh"].shape[0]
    num_layers = len(params["layers"])

    # Time-major flatten: row (t*B + b) holds x[b, t, :], so one matmul projects
    # the whole sequence per layer and timestep t is a contiguous row block.
    # (Single tiny XLA op; negligible at these shapes.)
    x_tm = jnp.transpose(x, (1, 0, 2)).reshape(T * B, D).astype(jnp.float32)

    args = [x_tm]
    in_specs = [pl.BlockSpec((T * B, D), lambda: (0, 0))]
    for layer in params["layers"]:
        for name in ("w_ih", "w_hh", "bias"):
            a = layer[name]
            args.append(a)
            in_specs.append(pl.BlockSpec(a.shape, lambda: (0, 0)))
    args += [params["w_fc"], params["b_fc"]]
    in_specs += [
        pl.BlockSpec(params["w_fc"].shape, lambda: (0, 0)),
        pl.BlockSpec(params["b_fc"].shape, lambda: (0, 0)),
    ]

    kernel = _make_fused_lstm_fc_kernel(num_layers, T, B, H)
    return pl.pallas_call(
        kernel,
        out_shape=jax.ShapeDtypeStruct((B, 1), jnp.float32),
        grid=(),
        in_specs=in_specs,
        out_specs=pl.BlockSpec((B, 1), lambda: (0, 0)),
        scratch_shapes=[pltpu.VMEM((T * B, H), jnp.float32)],
    )(*args)


# ---------------------------------------------------------------------------
# Deterministic parameter init (shapes follow nn.LSTM / nn.Linear)
# ---------------------------------------------------------------------------
def init_params(key, input_size, hidden_size, num_layers):
    bound = 1.0 / np.sqrt(hidden_size)
    layers = []
    for l in range(num_layers):
        d_in = input_size if l == 0 else hidden_size
        key, k1, k2, k3, k4 = jax.random.split(key, 5)
        # PyTorch stores weight_ih_l{k}: (4H, d_in); we keep the transposed
        # (d_in, 4H) layout so the kernel does x @ W.  Gate order: i, f, g, o.
        w_ih = jax.random.uniform(k1, (d_in, 4 * hidden_size), jnp.float32, -bound, bound)
        w_hh = jax.random.uniform(k2, (hidden_size, 4 * hidden_size), jnp.float32, -bound, bound)
        b_ih = jax.random.uniform(k3, (4 * hidden_size,), jnp.float32, -bound, bound)
        b_hh = jax.random.uniform(k4, (4 * hidden_size,), jnp.float32, -bound, bound)
        layers.append(dict(w_ih=w_ih, w_hh=w_hh, bias=(b_ih + b_hh).reshape(1, -1)))
    key, k5, k6 = jax.random.split(key, 3)
    fc_bound = 1.0 / np.sqrt(hidden_size)
    w_fc = jax.random.uniform(k5, (hidden_size, 1), jnp.float32, -fc_bound, fc_bound)
    b_fc = jax.random.uniform(k6, (1, 1), jnp.float32, -fc_bound, fc_bound)
    return dict(layers=layers, w_fc=w_fc, b_fc=b_fc)


# ---------------------------------------------------------------------------
# Pure-JAX reference (mirrors torch.nn.LSTM forward, eval mode)
# ---------------------------------------------------------------------------
def lstm_forward_ref(x, params):
    x_tbd = jnp.transpose(x, (1, 0, 2)).astype(jnp.float32)  # (T, B, D)
    for layer in params["layers"]:
        w_ih, w_hh, bias = layer["w_ih"], layer["w_hh"], layer["bias"]
        H = w_hh.shape[0]
        B = x_tbd.shape[1]

        def step(carry, x_t):
            h, c = carry
            gates = x_t @ w_ih + h @ w_hh + bias
            i = jax.nn.sigmoid(gates[:, 0 * H:1 * H])
            f = jax.nn.sigmoid(gates[:, 1 * H:2 * H])
            g = jnp.tanh(gates[:, 2 * H:3 * H])
            o = jax.nn.sigmoid(gates[:, 3 * H:4 * H])
            c = f * c + i * g
            h = o * jnp.tanh(c)
            return (h, c), h

        init = (jnp.zeros((B, H), jnp.float32), jnp.zeros((B, H), jnp.float32))
        _, x_tbd = lax.scan(step, init, x_tbd)
    h_last = x_tbd[-1]
    return h_last @ params["w_fc"] + params["b_fc"]


# ---------------------------------------------------------------------------
if __name__ == "__main__":
    # Small shapes consistent with the module: batch=2, seq=8, input=16, hidden=32, 2 layers.
    B, T, INPUT, HIDDEN, LAYERS = 2, 8, 16, 32, 2

    key = jax.random.PRNGKey(0)
    key, kx, kp = jax.random.split(key, 3)
    x = jax.random.normal(kx, (B, T, INPUT), jnp.float32)
    params = init_params(kp, INPUT, HIDDEN, LAYERS)

    out = lstm_forward(x, params)
    out = jax.block_until_ready(out)

    ref = lstm_forward_ref(x, params)
    np.testing.assert_allclose(np.asarray(out), np.asarray(ref), rtol=1e-5, atol=5e-5)
    assert out.shape == (B, 1)

    print("KERNEL_OK")
</pallas_src>

<mosaic_0001>
module attributes {stable_mosaic.version = 11 : i64} {
  func.func @kernel(%arg0: memref<16x16xf32, #tpu.memory_space<vmem>>, %arg1: memref<16x128xf32, #tpu.memory_space<vmem>>, %arg2: memref<32x128xf32, #tpu.memory_space<vmem>>, %arg3: memref<1x128xf32, #tpu.memory_space<vmem>>, %arg4: memref<32x128xf32, #tpu.memory_space<vmem>>, %arg5: memref<32x128xf32, #tpu.memory_space<vmem>>, %arg6: memref<1x128xf32, #tpu.memory_space<vmem>>, %arg7: memref<32x1xf32, #tpu.memory_space<vmem>>, %arg8: memref<1x1xf32, #tpu.memory_space<vmem>>, %arg9: memref<2x1xf32, #tpu.memory_space<vmem>>, %arg10: memref<16x32xf32, #tpu.memory_space<vmem>>) attributes {dimension_semantics = [], scalar_prefetch = 0 : i64, scratch_operands = 1 : i64, tpu.core_type = #tpu.core_type<tc>} {
    %c0 = arith.constant 0 : index
    %c0_0 = arith.constant 0 : index
    %0 = vector.load %arg0[%c0, %c0_0] : memref<16x16xf32, #tpu.memory_space<vmem>>, vector<16x16xf32>
    %c0_1 = arith.constant 0 : index
    %c0_2 = arith.constant 0 : index
    %1 = vector.load %arg1[%c0_1, %c0_2] : memref<16x128xf32, #tpu.memory_space<vmem>>, vector<16x128xf32>
    %c0_3 = arith.constant 0 : index
    %c0_4 = arith.constant 0 : index
    %2 = vector.load %arg2[%c0_3, %c0_4] : memref<32x128xf32, #tpu.memory_space<vmem>>, vector<32x128xf32>
    %c0_5 = arith.constant 0 : index
    %c0_6 = arith.constant 0 : index
    %3 = vector.load %arg3[%c0_5, %c0_6] : memref<1x128xf32, #tpu.memory_space<vmem>>, vector<1x128xf32>
    %cst = arith.constant dense<0.000000e+00> : vector<16x128xf32>
    %4 = tpu.matmul %0, %1, %cst {dimension_numbers = #tpu.dot_dimension_numbers<[1], [0], [0], [1], [0, 0, 1, 1], [], []>} : vector<16x16xf32>, vector<16x128xf32>, vector<16x128xf32> -> vector<16x128xf32>
    %5 = vector.broadcast %3 : vector<1x128xf32> to vector<16x128xf32>
    %6 = arith.addf %4, %5 : vector<16x128xf32>
    %cst_7 = arith.constant 0.000000e+00 : f32
    %7 = vector.broadcast %cst_7 : f32 to vector<2x32xf32>
    %cst_8 = arith.constant 0.000000e+00 : f32
    %8 = vector.broadcast %cst_8 : f32 to vector<2x32xf32>
    %9 = vector.extract_strided_slice %6 {offsets = [0, 0], sizes = [2, 128], strides = [1, 1]} : vector<16x128xf32> to vector<2x128xf32>
    %cst_9 = arith.constant dense<0.000000e+00> : vector<2x128xf32>
    %10 = tpu.matmul %7, %2, %cst_9 {dimension_numbers = #tpu.dot_dimension_numbers<[1], [0], [0], [1], [0, 0, 1, 1], [], []>} : vector<2x32xf32>, vector<32x128xf32>, vector<2x128xf32> -> vector<2x128xf32>
    %11 = arith.addf %9, %10 : vector<2x128xf32>
    %12 = vector.extract_strided_slice %11 {offsets = [0, 0], sizes = [2, 32], strides = [1, 1]} : vector<2x128xf32> to vector<2x32xf32>
    %13 = arith.negf %12 : vector<2x32xf32>
    %14 = math.exp %13 : vector<2x32xf32>
    %cst_10 = arith.constant 1.000000e+00 : f32
    %15 = vector.broadcast %cst_10 : f32 to vector<2x32xf32>
    %16 = arith.addf %15, %14 : vector<2x32xf32>
    %17 = arith.divf %15, %16 : vector<2x32xf32>
    %18 = vector.extract_strided_slice %11 {offsets = [0, 32], sizes = [2, 32], strides = [1, 1]} : vector<2x128xf32> to vector<2x32xf32>
    %19 = arith.negf %18 : vector<2x32xf32>
    %20 = math.exp %19 : vector<2x32xf32>
    %cst_11 = arith.constant 1.000000e+00 : f32
    %21 = vector.broadcast %cst_11 : f32 to vector<2x32xf32>
    %22 = arith.addf %21, %20 : vector<2x32xf32>
    %23 = arith.divf %21, %22 : vector<2x32xf32>
    %24 = vector.extract_strided_slice %11 {offsets = [0, 64], sizes = [2, 32], strides = [1, 1]} : vector<2x128xf32> to vector<2x32xf32>
    %25 = math.tanh %24 : vector<2x32xf32>
    %26 = vector.extract_strided_slice %11 {offsets = [0, 96], sizes = [2, 32], strides = [1, 1]} : vector<2x128xf32> to vector<2x32xf32>
    %27 = arith.negf %26 : vector<2x32xf32>
    %28 = math.exp %27 : vector<2x32xf32>
    %cst_12 = arith.constant 1.000000e+00 : f32
    %29 = vector.broadcast %cst_12 : f32 to vector<2x32xf32>
    %30 = arith.addf %29, %28 : vector<2x32xf32>
    %31 = arith.divf %29, %30 : vector<2x32xf32>
    %32 = arith.mulf %23, %8 : vector<2x32xf32>
    %33 = arith.mulf %17, %25 : vector<2x32xf32>
    %34 = arith.addf %32, %33 : vector<2x32xf32>
    %35 = math.tanh %34 : vector<2x32xf32>
    %36 = arith.mulf %31, %35 : vector<2x32xf32>
    %c0_13 = arith.constant 0 : index
    %c0_14 = arith.constant 0 : index
    %37 = vector.load %arg10[%c0_13, %c0_14] : memref<16x32xf32, #tpu.memory_space<vmem>>, vector<2x32xf32>
    tpu.vector_store %arg10[%c0_13, %c0_14], %36 {strides = array<i32>} : memref<16x32xf32, #tpu.memory_space<vmem>>, vector<2x32xf32>,
    %38 = vector.extract_strided_slice %6 {offsets = [2, 0], sizes = [2, 128], strides = [1, 1]} : vector<16x128xf32> to vector<2x128xf32>
    %cst_15 = arith.constant dense<0.000000e+00> : vector<2x128xf32>
    %39 = tpu.matmul %36, %2, %cst_15 {dimension_numbers = #tpu.dot_dimension_numbers<[1], [0], [0], [1], [0, 0, 1, 1], [], []>} : vector<2x32xf32>, vector<32x128xf32>, vector<2x128xf32> -> vector<2x128xf32>
    %40 = arith.addf %38, %39 : vector<2x128xf32>
    %41 = vector.extract_strided_slice %40 {offsets = [0, 0], sizes = [2, 32], strides = [1, 1]} : vector<2x128xf32> to vector<2x32xf32>
    %42 = arith.negf %41 : vector<2x32xf32>
    %43 = math.exp %42 : vector<2x32xf32>
    %cst_16 = arith.constant 1.000000e+00 : f32
    %44 = vector.broadcast %cst_16 : f32 to vector<2x32xf32>
    %45 = arith.addf %44, %43 : vector<2x32xf32>
    %46 = arith.divf %44, %45 : vector<2x32xf32>
    %47 = vector.extract_strided_slice %40 {offsets = [0, 32], sizes = [2, 32], strides = [1, 1]} : vector<2x128xf32> to vector<2x32xf32>
    %48 = arith.negf %47 : vector<2x32xf32>
    %49 = math.exp %48 : vector<2x32xf32>
    %cst_17 = arith.constant 1.000000e+00 : f32
    %50 = vector.broadcast %cst_17 : f32 to vector<2x32xf32>
    %51 = arith.addf %50, %49 : vector<2x32xf32>
    %52 = arith.divf %50, %51 : vector<2x32xf32>
    %53 = vector.extract_strided_slice %40 {offsets = [0, 64], sizes = [2, 32], strides = [1, 1]} : vector<2x128xf32> to vector<2x32xf32>
    %54 = math.tanh %53 : vector<2x32xf32>
    %55 = vector.extract_strided_slice %40 {offsets = [0, 96], sizes = [2, 32], strides = [1, 1]} : vector<2x128xf32> to vector<2x32xf32>
    %56 = arith.negf %55 : vector<2x32xf32>
    %57 = math.exp %56 : vector<2x32xf32>
    %cst_18 = arith.constant 1.000000e+00 : f32
    %58 = vector.broadcast %cst_18 : f32 to vector<2x32xf32>
    %59 = arith.addf %58, %57 : vector<2x32xf32>
    %60 = arith.divf %58, %59 : vector<2x32xf32>
    %61 = arith.mulf %52, %34 : vector<2x32xf32>
    %62 = arith.mulf %46, %54 : vector<2x32xf32>
    %63 = arith.addf %61, %62 : vector<2x32xf32>
    %64 = math.tanh %63 : vector<2x32xf32>
    %65 = arith.mulf %60, %64 : vector<2x32xf32>
    %c2 = arith.constant 2 : index
    %c0_19 = arith.constant 0 : index
    %66 = vector.load %arg10[%c2, %c0_19] : memref<16x32xf32, #tpu.memory_space<vmem>>, vector<2x32xf32>
    tpu.vector_store %arg10[%c2, %c0_19], %65 {strides = array<i32>} : memref<16x32xf32, #tpu.memory_space<vmem>>, vector<2x32xf32>,
    %67 = vector.extract_strided_slice %6 {offsets = [4, 0], sizes = [2, 128], strides = [1, 1]} : vector<16x128xf32> to vector<2x128xf32>
    %cst_20 = arith.constant dense<0.000000e+00> : vector<2x128xf32>
    %68 = tpu.matmul %65, %2, %cst_20 {dimension_numbers = #tpu.dot_dimension_numbers<[1], [0], [0], [1], [0, 0, 1, 1], [], []>} : vector<2x32xf32>, vector<32x128xf32>, vector<2x128xf32> -> vector<2x128xf32>
    %69 = arith.addf %67, %68 : vector<2x128xf32>
    %70 = vector.extract_strided_slice %69 {offsets = [0, 0], sizes = [2, 32], strides = [1, 1]} : vector<2x128xf32> to vector<2x32xf32>
    %71 = arith.negf %70 : vector<2x32xf32>
    %72 = math.exp %71 : vector<2x32xf32>
    %cst_21 = arith.constant 1.000000e+00 : f32
    %73 = vector.broadcast %cst_21 : f32 to vector<2x32xf32>
    %74 = arith.addf %73, %72 : vector<2x32xf32>
    %75 = arith.divf %73, %74 : vector<2x32xf32>
    %76 = vector.extract_strided_slice %69 {offsets = [0, 32], sizes = [2, 32], strides = [1, 1]} : vector<2x128xf32> to vector<2x32xf32>
    %77 = arith.negf %76 : vector<2x32xf32>
    %78 = math.exp %77 : vector<2x32xf32>
    %cst_22 = arith.constant 1.000000e+00 : f32
    %79 = vector.broadcast %cst_22 : f32 to vector<2x32xf32>
    %80 = arith.addf %79, %78 : vector<2x32xf32>
    %81 = arith.divf %79, %80 : vector<2x32xf32>
    %82 = vector.extract_strided_slice %69 {offsets = [0, 64], sizes = [2, 32], strides = [1, 1]} : vector<2x128xf32> to vector<2x32xf32>
    %83 = math.tanh %82 : vector<2x32xf32>
    %84 = vector.extract_strided_slice %69 {offsets = [0, 96], sizes = [2, 32], strides = [1, 1]} : vector<2x128xf32> to vector<2x32xf32>
    %85 = arith.negf %84 : vector<2x32xf32>
    %86 = math.exp %85 : vector<2x32xf32>
    %cst_23 = arith.constant 1.000000e+00 : f32
    %87 = vector.broadcast %cst_23 : f32 to vector<2x32xf32>
    %88 = arith.addf %87, %86 : vector<2x32xf32>
    %89 = arith.divf %87, %88 : vector<2x32xf32>
    %90 = arith.mulf %81, %63 : vector<2x32xf32>
    %91 = arith.mulf %75, %83 : vector<2x32xf32>
    %92 = arith.addf %90, %91 : vector<2x32xf32>
    %93 = math.tanh %92 : vector<2x32xf32>
    %94 = arith.mulf %89, %93 : vector<2x32xf32>
    %c4 = arith.constant 4 : index
    %c0_24 = arith.constant 0 : index
    %95 = vector.load %arg10[%c4, %c0_24] : memref<16x32xf32, #tpu.memory_space<vmem>>, vector<2x32xf32>
    tpu.vector_store %arg10[%c4, %c0_24], %94 {strides = array<i32>} : memref<16x32xf32, #tpu.memory_space<vmem>>, vector<2x32xf32>,
    %96 = vector.extract_strided_slice %6 {offsets = [6, 0], sizes = [2, 128], strides = [1, 1]} : vector<16x128xf32> to vector<2x128xf32>
    %cst_25 = arith.constant dense<0.000000e+00> : vector<2x128xf32>
    %97 = tpu.matmul %94, %2, %cst_25 {dimension_numbers = #tpu.dot_dimension_numbers<[1], [0], [0], [1], [0, 0, 1, 1], [], []>} : vector<2x32xf32>, vector<32x128xf32>, vector<2x128xf32> -> vector<2x128xf32>
    %98 = arith.addf %96, %97 : vector<2x128xf32>
    %99 = vector.extract_strided_slice %98 {offsets = [0, 0], sizes = [2, 32], strides = [1, 1]} : vector<2x128xf32> to vector<2x32xf32>
    %100 = arith.negf %99 : vector<2x32xf32>
    %101 = math.exp %100 : vector<2x32xf32>
    %cst_26 = arith.constant 1.000000e+00 : f32
    %102 = vector.broadcast %cst_26 : f32 to vector<2x32xf32>
    %103 = arith.addf %102, %101 : vector<2x32xf32>
    %104 = arith.divf %102, %103 : vector<2x32xf32>
    %105 = vector.extract_strided_slice %98 {offsets = [0, 32], sizes = [2, 32], strides = [1, 1]} : vector<2x128xf32> to vector<2x32xf32>
    %106 = arith.negf %105 : vector<2x32xf32>
    %107 = math.exp %106 : vector<2x32xf32>
    %cst_27 = arith.constant 1.000000e+00 : f32
    %108 = vector.broadcast %cst_27 : f32 to vector<2x32xf32>
    %109 = arith.addf %108, %107 : vector<2x32xf32>
    %110 = arith.divf %108, %109 : vector<2x32xf32>
    %111 = vector.extract_strided_slice %98 {offsets = [0, 64], sizes = [2, 32], strides = [1, 1]} : vector<2x128xf32> to vector<2x32xf32>
    %112 = math.tanh %111 : vector<2x32xf32>
    %113 = vector.extract_strided_slice %98 {offsets = [0, 96], sizes = [2, 32], strides = [1, 1]} : vector<2x128xf32> to vector<2x32xf32>
    %114 = arith.negf %113 : vector<2x32xf32>
    %115 = math.exp %114 : vector<2x32xf32>
    %cst_28 = arith.constant 1.000000e+00 : f32
    %116 = vector.broadcast %cst_28 : f32 to vector<2x32xf32>
    %117 = arith.addf %116, %115 : vector<2x32xf32>
    %118 = arith.divf %116, %117 : vector<2x32xf32>
    %119 = arith.mulf %110, %92 : vector<2x32xf32>
    %120 = arith.mulf %104, %112 : vector<2x32xf32>
    %121 = arith.addf %119, %120 : vector<2x32xf32>
    %122 = math.tanh %121 : vector<2x32xf32>
    %123 = arith.mulf %118, %122 : vector<2x32xf32>
    %c6 = arith.constant 6 : index
    %c0_29 = arith.constant 0 : index
    %124 = vector.load %arg10[%c6, %c0_29] : memref<16x32xf32, #tpu.memory_space<vmem>>, vector<2x32xf32>
    tpu.vector_store %arg10[%c6, %c0_29], %123 {strides = array<i32>} : memref<16x32xf32, #tpu.memory_space<vmem>>, vector<2x32xf32>,
    %125 = vector.extract_strided_slice %6 {offsets = [8, 0], sizes = [2, 128], strides = [1, 1]} : vector<16x128xf32> to vector<2x128xf32>
    %cst_30 = arith.constant dense<0.000000e+00> : vector<2x128xf32>
    %126 = tpu.matmul %123, %2, %cst_30 {dimension_numbers = #tpu.dot_dimension_numbers<[1], [0], [0], [1], [0, 0, 1, 1], [], []>} : vector<2x32xf32>, vector<32x128xf32>, vector<2x128xf32> -> vector<2x128xf32>
    %127 = arith.addf %125, %126 : vector<2x128xf32>
    %128 = vector.extract_strided_slice %127 {offsets = [0, 0], sizes = [2, 32], strides = [1, 1]} : vector<2x128xf32> to vector<2x32xf32>
    %129 = arith.negf %128 : vector<2x32xf32>
    %130 = math.exp %129 : vector<2x32xf32>
    %cst_31 = arith.constant 1.000000e+00 : f32
    %131 = vector.broadcast %cst_31 : f32 to vector<2x32xf32>
    %132 = arith.addf %131, %130 : vector<2x32xf32>
    %133 = arith.divf %131, %132 : vector<2x32xf32>
    %134 = vector.extract_strided_slice %127 {offsets = [0, 32], sizes = [2, 32], strides = [1, 1]} : vector<2x128xf32> to vector<2x32xf32>
    %135 = arith.negf %134 : vector<2x32xf32>
    %136 = math.exp %135 : vector<2x32xf32>
    %cst_32 = arith.constant 1.000000e+00 : f32
    %137 = vector.broadcast %cst_32 : f32 to vector<2x32xf32>
    %138 = arith.addf %137, %136 : vector<2x32xf32>
    %139 = arith.divf %137, %138 : vector<2x32xf32>
    %140 = vector.extract_strided_slice %127 {offsets = [0, 64], sizes = [2, 32], strides = [1, 1]} : vector<2x128xf32> to vector<2x32xf32>
    %141 = math.tanh %140 : vector<2x32xf32>
    %142 = vector.extract_strided_slice %127 {offsets = [0, 96], sizes = [2, 32], strides = [1, 1]} : vector<2x128xf32> to vector<2x32xf32>
    %143 = arith.negf %142 : vector<2x32xf32>
    %144 = math.exp %143 : vector<2x32xf32>
    %cst_33 = arith.constant 1.000000e+00 : f32
    %145 = vector.broadcast %cst_33 : f32 to vector<2x32xf32>
    %146 = arith.addf %145, %144 : vector<2x32xf32>
    %147 = arith.divf %145, %146 : vector<2x32xf32>
    %148 = arith.mulf %139, %121 : vector<2x32xf32>
    %149 = arith.mulf %133, %141 : vector<2x32xf32>
    %150 = arith.addf %148, %149 : vector<2x32xf32>
    %151 = math.tanh %150 : vector<2x32xf32>
    %152 = arith.mulf %147, %151 : vector<2x32xf32>
    %c8 = arith.constant 8 : index
    %c0_34 = arith.constant 0 : index
    %153 = vector.load %arg10[%c8, %c0_34] : memref<16x32xf32, #tpu.memory_space<vmem>>, vector<2x32xf32>
    tpu.vector_store %arg10[%c8, %c0_34], %152 {strides = array<i32>} : memref<16x32xf32, #tpu.memory_space<vmem>>, vector<2x32xf32>,
    %154 = vector.extract_strided_slice %6 {offsets = [10, 0], sizes = [2, 128], strides = [1, 1]} : vector<16x128xf32> to vector<2x128xf32>
    %cst_35 = arith.constant dense<0.000000e+00> : vector<2x128xf32>
    %155 = tpu.matmul %152, %2, %cst_35 {dimension_numbers = #tpu.dot_dimension_numbers<[1], [0], [0], [1], [0, 0, 1, 1], [], []>} : vector<2x32xf32>, vector<32x128xf32>, vector<2x128xf32> -> vector<2x128xf32>
    %156 = arith.addf %154, %155 : vector<2x128xf32>
    %157 = vector.extract_strided_slice %156 {offsets = [0, 0], sizes = [2, 32], strides = [1, 1]} : vector<2x128xf32> to vector<2x32xf32>
    %158 = arith.negf %157 : vector<2x32xf32>
    %159 = math.exp %158 : vector<2x32xf32>
    %cst_36 = arith.constant 1.000000e+00 : f32
    %160 = vector.broadcast %cst_36 : f32 to vector<2x32xf32>
    %161 = arith.addf %160, %159 : vector<2x32xf32>
    %162 = arith.divf %160, %161 : vector<2x32xf32>
    %163 = vector.extract_strided_slice %156 {offsets = [0, 32], sizes = [2, 32], strides = [1, 1]} : vector<2x128xf32> to vector<2x32xf32>
    %164 = arith.negf %163 : vector<2x32xf32>
    %165 = math.exp %164 : vector<2x32xf32>
    %cst_37 = arith.constant 1.000000e+00 : f32
    %166 = vector.broadcast %cst_37 : f32 to vector<2x32xf32>
    %167 = arith.addf %166, %165 : vector<2x32xf32>
    %168 = arith.divf %166, %167 : vector<2x32xf32>
    %169 = vector.extract_strided_slice %156 {offsets = [0, 64], sizes = [2, 32], strides = [1, 1]} : vector<2x128xf32> to vector<2x32xf32>
    %170 = math.tanh %169 : vector<2x32xf32>
    %171 = vector.extract_strided_slice %156 {offsets = [0, 96], sizes = [2, 32], strides = [1, 1]} : vector<2x128xf32> to vector<2x32xf32>
    %172 = arith.negf %171 : vector<2x32xf32>
    %173 = math.exp %172 : vector<2x32xf32>
    %cst_38 = arith.constant 1.000000e+00 : f32
    %174 = vector.broadcast %cst_38 : f32 to vector<2x32xf32>
    %175 = arith.addf %174, %173 : vector<2x32xf32>
    %176 = arith.divf %174, %175 : vector<2x32xf32>
    %177 = arith.mulf %168, %150 : vector<2x32xf32>
    %178 = arith.mulf %162, %170 : vector<2x32xf32>
    %179 = arith.addf %177, %178 : vector<2x32xf32>
    %180 = math.tanh %179 : vector<2x32xf32>
    %181 = arith.mulf %176, %180 : vector<2x32xf32>
    %c10 = arith.constant 10 : index
    %c0_39 = arith.constant 0 : index
    %182 = vector.load %arg10[%c10, %c0_39] : memref<16x32xf32, #tpu.memory_space<vmem>>, vector<2x32xf32>
    tpu.vector_store %arg10[%c10, %c0_39], %181 {strides = array<i32>} : memref<16x32xf32, #tpu.memory_space<vmem>>, vector<2x32xf32>,
    %183 = vector.extract_strided_slice %6 {offsets = [12, 0], sizes = [2, 128], strides = [1, 1]} : vector<16x128xf32> to vector<2x128xf32>
    %cst_40 = arith.constant dense<0.000000e+00> : vector<2x128xf32>
    %184 = tpu.matmul %181, %2, %cst_40 {dimension_numbers = #tpu.dot_dimension_numbers<[1], [0], [0], [1], [0, 0, 1, 1], [], []>} : vector<2x32xf32>, vector<32x128xf32>, vector<2x128xf32> -> vector<2x128xf32>
    %185 = arith.addf %183, %184 : vector<2x128xf32>
    %186 = vector.extract_strided_slice %185 {offsets = [0, 0], sizes = [2, 32], strides = [1, 1]} : vector<2x128xf32> to vector<2x32xf32>
    %187 = arith.negf %186 : vector<2x32xf32>
    %188 = math.exp %187 : vector<2x32xf32>
    %cst_41 = arith.constant 1.000000e+00 : f32
    %189 = vector.broadcast %cst_41 : f32 to vector<2x32xf32>
    %190 = arith.addf %189, %188 : vector<2x32xf32>
    %191 = arith.divf %189, %190 : vector<2x32xf32>
    %192 = vector.extract_strided_slice %185 {offsets = [0, 32], sizes = [2, 32], strides = [1, 1]} : vector<2x128xf32> to vector<2x32xf32>
    %193 = arith.negf %192 : vector<2x32xf32>
    %194 = math.exp %193 : vector<2x32xf32>
    %cst_42 = arith.constant 1.000000e+00 : f32
    %195 = vector.broadcast %cst_42 : f32 to vector<2x32xf32>
    %196 = arith.addf %195, %194 : vector<2x32xf32>
    %197 = arith.divf %195, %196 : vector<2x32xf32>
    %198 = vector.extract_strided_slice %185 {offsets = [0, 64], sizes = [2, 32], strides = [1, 1]} : vector<2x128xf32> to vector<2x32xf32>
    %199 = math.tanh %198 : vector<2x32xf32>
    %200 = vector.extract_strided_slice %185 {offsets = [0, 96], sizes = [2, 32], strides = [1, 1]} : vector<2x128xf32> to vector<2x32xf32>
    %201 = arith.negf %200 : vector<2x32xf32>
    %202 = math.exp %201 : vector<2x32xf32>
    %cst_43 = arith.constant 1.000000e+00 : f32
    %203 = vector.broadcast %cst_43 : f32 to vector<2x32xf32>
    %204 = arith.addf %203, %202 : vector<2x32xf32>
    %205 = arith.divf %203, %204 : vector<2x32xf32>
    %206 = arith.mulf %197, %179 : vector<2x32xf32>
    %207 = arith.mulf %191, %199 : vector<2x32xf32>
    %208 = arith.addf %206, %207 : vector<2x32xf32>
    %209 = math.tanh %208 : vector<2x32xf32>
    %210 = arith.mulf %205, %209 : vector<2x32xf32>
    %c12 = arith.constant 12 : index
    %c0_44 = arith.constant 0 : index
    %211 = vector.load %arg10[%c12, %c0_44] : memref<16x32xf32, #tpu.memory_space<vmem>>, vector<2x32xf32>
    tpu.vector_store %arg10[%c12, %c0_44], %210 {strides = array<i32>} : memref<16x32xf32, #tpu.memory_space<vmem>>, vector<2x32xf32>,
    %212 = vector.extract_strided_slice %6 {offsets = [14, 0], sizes = [2, 128], strides = [1, 1]} : vector<16x128xf32> to vector<2x128xf32>
    %cst_45 = arith.constant dense<0.000000e+00> : vector<2x128xf32>
    %213 = tpu.matmul %210, %2, %cst_45 {dimension_numbers = #tpu.dot_dimension_numbers<[1], [0], [0], [1], [0, 0, 1, 1], [], []>} : vector<2x32xf32>, vector<32x128xf32>, vector<2x128xf32> -> vector<2x128xf32>
    %214 = arith.addf %212, %213 : vector<2x128xf32>
    %215 = vector.extract_strided_slice %214 {offsets = [0, 0], sizes = [2, 32], strides = [1, 1]} : vector<2x128xf32> to vector<2x32xf32>
    %216 = arith.negf %215 : vector<2x32xf32>
    %217 = math.exp %216 : vector<2x32xf32>
    %cst_46 = arith.constant 1.000000e+00 : f32
    %218 = vector.broadcast %cst_46 : f32 to vector<2x32xf32>
    %219 = arith.addf %218, %217 : vector<2x32xf32>
    %220 = arith.divf %218, %219 : vector<2x32xf32>
    %221 = vector.extract_strided_slice %214 {offsets = [0, 32], sizes = [2, 32], strides = [1, 1]} : vector<2x128xf32> to vector<2x32xf32>
    %222 = arith.negf %221 : vector<2x32xf32>
    %223 = math.exp %222 : vector<2x32xf32>
    %cst_47 = arith.constant 1.000000e+00 : f32
    %224 = vector.broadcast %cst_47 : f32 to vector<2x32xf32>
    %225 = arith.addf %224, %223 : vector<2x32xf32>
    %226 = arith.divf %224, %225 : vector<2x32xf32>
    %227 = vector.extract_strided_slice %214 {offsets = [0, 64], sizes = [2, 32], strides = [1, 1]} : vector<2x128xf32> to vector<2x32xf32>
    %228 = math.tanh %227 : vector<2x32xf32>
    %229 = vector.extract_strided_slice %214 {offsets = [0, 96], sizes = [2, 32], strides = [1, 1]} : vector<2x128xf32> to vector<2x32xf32>
    %230 = arith.negf %229 : vector<2x32xf32>
    %231 = math.exp %230 : vector<2x32xf32>
    %cst_48 = arith.constant 1.000000e+00 : f32
    %232 = vector.broadcast %cst_48 : f32 to vector<2x32xf32>
    %233 = arith.addf %232, %231 : vector<2x32xf32>
    %234 = arith.divf %232, %233 : vector<2x32xf32>
    %235 = arith.mulf %226, %208 : vector<2x32xf32>
    %236 = arith.mulf %220, %228 : vector<2x32xf32>
    %237 = arith.addf %235, %236 : vector<2x32xf32>
    %238 = math.tanh %237 : vector<2x32xf32>
    %239 = arith.mulf %234, %238 : vector<2x32xf32>
    %c14 = arith.constant 14 : index
    %c0_49 = arith.constant 0 : index
    %240 = vector.load %arg10[%c14, %c0_49] : memref<16x32xf32, #tpu.memory_space<vmem>>, vector<2x32xf32>
    tpu.vector_store %arg10[%c14, %c0_49], %239 {strides = array<i32>} : memref<16x32xf32, #tpu.memory_space<vmem>>, vector<2x32xf32>,
    %c0_50 = arith.constant 0 : index
    %c0_51 = arith.constant 0 : index
    %241 = vector.load %arg10[%c0_50, %c0_51] : memref<16x32xf32, #tpu.memory_space<vmem>>, vector<16x32xf32>
    %c0_52 = arith.constant 0 : index
    %c0_53 = arith.constant 0 : index
    %242 = vector.load %arg4[%c0_52, %c0_53] : memref<32x128xf32, #tpu.memory_space<vmem>>, vector<32x128xf32>
    %c0_54 = arith.constant 0 : index
    %c0_55 = arith.constant 0 : index
    %243 = vector.load %arg5[%c0_54, %c0_55] : memref<32x128xf32, #tpu.memory_space<vmem>>, vector<32x128xf32>
    %c0_56 = arith.constant 0 : index
    %c0_57 = arith.constant 0 : index
    %244 = vector.load %arg6[%c0_56, %c0_57] : memref<1x128xf32, #tpu.memory_space<vmem>>, vector<1x128xf32>
    %cst_58 = arith.constant dense<0.000000e+00> : vector<16x128xf32>
    %245 = tpu.matmul %241, %242, %cst_58 {dimension_numbers = #tpu.dot_dimension_numbers<[1], [0], [0], [1], [0, 0, 1, 1], [], []>} : vector<16x32xf32>, vector<32x128xf32>, vector<16x128xf32> -> vector<16x128xf32>
    %246 = vector.broadcast %244 : vector<1x128xf32> to vector<16x128xf32>
    %247 = arith.addf %245, %246 : vector<16x128xf32>
    %cst_59 = arith.constant 0.000000e+00 : f32
    %248 = vector.broadcast %cst_59 : f32 to vector<2x32xf32>
    %cst_60 = arith.constant 0.000000e+00 : f32
    %249 = vector.broadcast %cst_60 : f32 to vector<2x32xf32>
    %250 = vector.extract_strided_slice %247 {offsets = [0, 0], sizes = [2, 128], strides = [1, 1]} : vector<16x128xf32> to vector<2x128xf32>
    %cst_61 = arith.constant dense<0.000000e+00> : vector<2x128xf32>
    %251 = tpu.matmul %248, %243, %cst_61 {dimension_numbers = #tpu.dot_dimension_numbers<[1], [0], [0], [1], [0, 0, 1, 1], [], []>} : vector<2x32xf32>, vector<32x128xf32>, vector<2x128xf32> -> vector<2x128xf32>
    %252 = arith.addf %250, %251 : vector<2x128xf32>
    %253 = vector.extract_strided_slice %252 {offsets = [0, 0], sizes = [2, 32], strides = [1, 1]} : vector<2x128xf32> to vector<2x32xf32>
    %254 = arith.negf %253 : vector<2x32xf32>
    %255 = math.exp %254 : vector<2x32xf32>
    %cst_62 = arith.constant 1.000000e+00 : f32
    %256 = vector.broadcast %cst_62 : f32 to vector<2x32xf32>
    %257 = arith.addf %256, %255 : vector<2x32xf32>
    %258 = arith.divf %256, %257 : vector<2x32xf32>
    %259 = vector.extract_strided_slice %252 {offsets = [0, 32], sizes = [2, 32], strides = [1, 1]} : vector<2x128xf32> to vector<2x32xf32>
    %260 = arith.negf %259 : vector<2x32xf32>
    %261 = math.exp %260 : vector<2x32xf32>
    %cst_63 = arith.constant 1.000000e+00 : f32
    %262 = vector.broadcast %cst_63 : f32 to vector<2x32xf32>
    %263 = arith.addf %262, %261 : vector<2x32xf32>
    %264 = arith.divf %262, %263 : vector<2x32xf32>
    %265 = vector.extract_strided_slice %252 {offsets = [0, 64], sizes = [2, 32], strides = [1, 1]} : vector<2x128xf32> to vector<2x32xf32>
    %266 = math.tanh %265 : vector<2x32xf32>
    %267 = vector.extract_strided_slice %252 {offsets = [0, 96], sizes = [2, 32], strides = [1, 1]} : vector<2x128xf32> to vector<2x32xf32>
    %268 = arith.negf %267 : vector<2x32xf32>
    %269 = math.exp %268 : vector<2x32xf32>
    %cst_64 = arith.constant 1.000000e+00 : f32
    %270 = vector.broadcast %cst_64 : f32 to vector<2x32xf32>
    %271 = arith.addf %270, %269 : vector<2x32xf32>
    %272 = arith.divf %270, %271 : vector<2x32xf32>
    %273 = arith.mulf %264, %249 : vector<2x32xf32>
    %274 = arith.mulf %258, %266 : vector<2x32xf32>
    %275 = arith.addf %273, %274 : vector<2x32xf32>
    %276 = math.tanh %275 : vector<2x32xf32>
    %277 = arith.mulf %272, %276 : vector<2x32xf32>
    %278 = vector.extract_strided_slice %247 {offsets = [2, 0], sizes = [2, 128], strides = [1, 1]} : vector<16x128xf32> to vector<2x128xf32>
    %cst_65 = arith.constant dense<0.000000e+00> : vector<2x128xf32>
    %279 = tpu.matmul %277, %243, %cst_65 {dimension_numbers = #tpu.dot_dimension_numbers<[1], [0], [0], [1], [0, 0, 1, 1], [], []>} : vector<2x32xf32>, vector<32x128xf32>, vector<2x128xf32> -> vector<2x128xf32>
    %280 = arith.addf %278, %279 : vector<2x128xf32>
    %281 = vector.extract_strided_slice %280 {offsets = [0, 0], sizes = [2, 32], strides = [1, 1]} : vector<2x128xf32> to vector<2x32xf32>
    %282 = arith.negf %281 : vector<2x32xf32>
    %283 = math.exp %282 : vector<2x32xf32>
    %cst_66 = arith.constant 1.000000e+00 : f32
    %284 = vector.broadcast %cst_66 : f32 to vector<2x32xf32>
    %285 = arith.addf %284, %283 : vector<2x32xf32>
    %286 = arith.divf %284, %285 : vector<2x32xf32>
    %287 = vector.extract_strided_slice %280 {offsets = [0, 32], sizes = [2, 32], strides = [1, 1]} : vector<2x128xf32> to vector<2x32xf32>
    %288 = arith.negf %287 : vector<2x32xf32>
    %289 = math.exp %288 : vector<2x32xf32>
    %cst_67 = arith.constant 1.000000e+00 : f32
    %290 = vector.broadcast %cst_67 : f32 to vector<2x32xf32>
    %291 = arith.addf %290, %289 : vector<2x32xf32>
    %292 = arith.divf %290, %291 : vector<2x32xf32>
    %293 = vector.extract_strided_slice %280 {offsets = [0, 64], sizes = [2, 32], strides = [1, 1]} : vector<2x128xf32> to vector<2x32xf32>
    %294 = math.tanh %293 : vector<2x32xf32>
    %295 = vector.extract_strided_slice %280 {offsets = [0, 96], sizes = [2, 32], strides = [1, 1]} : vector<2x128xf32> to vector<2x32xf32>
    %296 = arith.negf %295 : vector<2x32xf32>
    %297 = math.exp %296 : vector<2x32xf32>
    %cst_68 = arith.constant 1.000000e+00 : f32
    %298 = vector.broadcast %cst_68 : f32 to vector<2x32xf32>
    %299 = arith.addf %298, %297 : vector<2x32xf32>
    %300 = arith.divf %298, %299 : vector<2x32xf32>
    %301 = arith.mulf %292, %275 : vector<2x32xf32>
    %302 = arith.mulf %286, %294 : vector<2x32xf32>
    %303 = arith.addf %301, %302 : vector<2x32xf32>
    %304 = math.tanh %303 : vector<2x32xf32>
    %305 = arith.mulf %300, %304 : vector<2x32xf32>
    %306 = vector.extract_strided_slice %247 {offsets = [4, 0], sizes = [2, 128], strides = [1, 1]} : vector<16x128xf32> to vector<2x128xf32>
    %cst_69 = arith.constant dense<0.000000e+00> : vector<2x128xf32>
    %307 = tpu.matmul %305, %243, %cst_69 {dimension_numbers = #tpu.dot_dimension_numbers<[1], [0], [0], [1], [0, 0, 1, 1], [], []>} : vector<2x32xf32>, vector<32x128xf32>, vector<2x128xf32> -> vector<2x128xf32>
    %308 = arith.addf %306, %307 : vector<2x128xf32>
    %309 = vector.extract_strided_slice %308 {offsets = [0, 0], sizes = [2, 32], strides = [1, 1]} : vector<2x128xf32> to vector<2x32xf32>
    %310 = arith.negf %309 : vector<2x32xf32>
    %311 = math.exp %310 : vector<2x32xf32>
    %cst_70 = arith.constant 1.000000e+00 : f32
    %312 = vector.broadcast %cst_70 : f32 to vector<2x32xf32>
    %313 = arith.addf %312, %311 : vector<2x32xf32>
    %314 = arith.divf %312, %313 : vector<2x32xf32>
    %315 = vector.extract_strided_slice %308 {offsets = [0, 32], sizes = [2, 32], strides = [1, 1]} : vector<2x128xf32> to vector<2x32xf32>
    %316 = arith.negf %315 : vector<2x32xf32>
    %317 = math.exp %316 : vector<2x32xf32>
    %cst_71 = arith.constant 1.000000e+00 : f32
    %318 = vector.broadcast %cst_71 : f32 to vector<2x32xf32>
    %319 = arith.addf %318, %317 : vector<2x32xf32>
    %320 = arith.divf %318, %319 : vector<2x32xf32>
    %321 = vector.extract_strided_slice %308 {offsets = [0, 64], sizes = [2, 32], strides = [1, 1]} : vector<2x128xf32> to vector<2x32xf32>
    %322 = math.tanh %321 : vector<2x32xf32>
    %323 = vector.extract_strided_slice %308 {offsets = [0, 96], sizes = [2, 32], strides = [1, 1]} : vector<2x128xf32> to vector<2x32xf32>
    %324 = arith.negf %323 : vector<2x32xf32>
    %325 = math.exp %324 : vector<2x32xf32>
    %cst_72 = arith.constant 1.000000e+00 : f32
    %326 = vector.broadcast %cst_72 : f32 to vector<2x32xf32>
    %327 = arith.addf %326, %325 : vector<2x32xf32>
    %328 = arith.divf %326, %327 : vector<2x32xf32>
    %329 = arith.mulf %320, %303 : vector<2x32xf32>
    %330 = arith.mulf %314, %322 : vector<2x32xf32>
    %331 = arith.addf %329, %330 : vector<2x32xf32>
    %332 = math.tanh %331 : vector<2x32xf32>
    %333 = arith.mulf %328, %332 : vector<2x32xf32>
    %334 = vector.extract_strided_slice %247 {offsets = [6, 0], sizes = [2, 128], strides = [1, 1]} : vector<16x128xf32> to vector<2x128xf32>
    %cst_73 = arith.constant dense<0.000000e+00> : vector<2x128xf32>
    %335 = tpu.matmul %333, %243, %cst_73 {dimension_numbers = #tpu.dot_dimension_numbers<[1], [0], [0], [1], [0, 0, 1, 1], [], []>} : vector<2x32xf32>, vector<32x128xf32>, vector<2x128xf32> -> vector<2x128xf32>
    %336 = arith.addf %334, %335 : vector<2x128xf32>
    %337 = vector.extract_strided_slice %336 {offsets = [0, 0], sizes = [2, 32], strides = [1, 1]} : vector<2x128xf32> to vector<2x32xf32>
    %338 = arith.negf %337 : vector<2x32xf32>
    %339 = math.exp %338 : vector<2x32xf32>
    %cst_74 = arith.constant 1.000000e+00 : f32
    %340 = vector.broadcast %cst_74 : f32 to vector<2x32xf32>
    %341 = arith.addf %340, %339 : vector<2x32xf32>
    %342 = arith.divf %340, %341 : vector<2x32xf32>
    %343 = vector.extract_strided_slice %336 {offsets = [0, 32], sizes = [2, 32], strides = [1, 1]} : vector<2x128xf32> to vector<2x32xf32>
    %344 = arith.negf %343 : vector<2x32xf32>
    %345 = math.exp %344 : vector<2x32xf32>
    %cst_75 = arith.constant 1.000000e+00 : f32
    %346 = vector.broadcast %cst_75 : f32 to vector<2x32xf32>
    %347 = arith.addf %346, %345 : vector<2x32xf32>
    %348 = arith.divf %346, %347 : vector<2x32xf32>
    %349 = vector.extract_strided_slice %336 {offsets = [0, 64], sizes = [2, 32], strides = [1, 1]} : vector<2x128xf32> to vector<2x32xf32>
    %350 = math.tanh %349 : vector<2x32xf32>
    %351 = vector.extract_strided_slice %336 {offsets = [0, 96], sizes = [2, 32], strides = [1, 1]} : vector<2x128xf32> to vector<2x32xf32>
    %352 = arith.negf %351 : vector<2x32xf32>
    %353 = math.exp %352 : vector<2x32xf32>
    %cst_76 = arith.constant 1.000000e+00 : f32
    %354 = vector.broadcast %cst_76 : f32 to vector<2x32xf32>
    %355 = arith.addf %354, %353 : vector<2x32xf32>
    %356 = arith.divf %354, %355 : vector<2x32xf32>
    %357 = arith.mulf %348, %331 : vector<2x32xf32>
    %358 = arith.mulf %342, %350 : vector<2x32xf32>
    %359 = arith.addf %357, %358 : vector<2x32xf32>
    %360 = math.tanh %359 : vector<2x32xf32>
    %361 = arith.mulf %356, %360 : vector<2x32xf32>
    %362 = vector.extract_strided_slice %247 {offsets = [8, 0], sizes = [2, 128], strides = [1, 1]} : vector<16x128xf32> to vector<2x128xf32>
    %cst_77 = arith.constant dense<0.000000e+00> : vector<2x128xf32>
    %363 = tpu.matmul %361, %243, %cst_77 {dimension_numbers = #tpu.dot_dimension_numbers<[1], [0], [0], [1], [0, 0, 1, 1], [], []>} : vector<2x32xf32>, vector<32x128xf32>, vector<2x128xf32> -> vector<2x128xf32>
    %364 = arith.addf %362, %363 : vector<2x128xf32>
    %365 = vector.extract_strided_slice %364 {offsets = [0, 0], sizes = [2, 32], strides = [1, 1]} : vector<2x128xf32> to vector<2x32xf32>
    %366 = arith.negf %365 : vector<2x32xf32>
    %367 = math.exp %366 : vector<2x32xf32>
    %cst_78 = arith.constant 1.000000e+00 : f32
    %368 = vector.broadcast %cst_78 : f32 to vector<2x32xf32>
    %369 = arith.addf %368, %367 : vector<2x32xf32>
    %370 = arith.divf %368, %369 : vector<2x32xf32>
    %371 = vector.extract_strided_slice %364 {offsets = [0, 32], sizes = [2, 32], strides = [1, 1]} : vector<2x128xf32> to vector<2x32xf32>
    %372 = arith.negf %371 : vector<2x32xf32>
    %373 = math.exp %372 : vector<2x32xf32>
    %cst_79 = arith.constant 1.000000e+00 : f32
    %374 = vector.broadcast %cst_79 : f32 to vector<2x32xf32>
    %375 = arith.addf %374, %373 : vector<2x32xf32>
    %376 = arith.divf %374, %375 : vector<2x32xf32>
    %377 = vector.extract_strided_slice %364 {offsets = [0, 64], sizes = [2, 32], strides = [1, 1]} : vector<2x128xf32> to vector<2x32xf32>
    %378 = math.tanh %377 : vector<2x32xf32>
    %379 = vector.extract_strided_slice %364 {offsets = [0, 96], sizes = [2, 32], strides = [1, 1]} : vector<2x128xf32> to vector<2x32xf32>
    %380 = arith.negf %379 : vector<2x32xf32>
    %381 = math.exp %380 : vector<2x32xf32>
    %cst_80 = arith.constant 1.000000e+00 : f32
    %382 = vector.broadcast %cst_80 : f32 to vector<2x32xf32>
    %383 = arith.addf %382, %381 : vector<2x32xf32>
    %384 = arith.divf %382, %383 : vector<2x32xf32>
    %385 = arith.mulf %376, %359 : vector<2x32xf32>
    %386 = arith.mulf %370, %378 : vector<2x32xf32>
    %387 = arith.addf %385, %386 : vector<2x32xf32>
    %388 = math.tanh %387 : vector<2x32xf32>
    %389 = arith.mulf %384, %388 : vector<2x32xf32>
    %390 = vector.extract_strided_slice %247 {offsets = [10, 0], sizes = [2, 128], strides = [1, 1]} : vector<16x128xf32> to vector<2x128xf32>
    %cst_81 = arith.constant dense<0.000000e+00> : vector<2x128xf32>
    %391 = tpu.matmul %389, %243, %cst_81 {dimension_numbers = #tpu.dot_dimension_numbers<[1], [0], [0], [1], [0, 0, 1, 1], [], []>} : vector<2x32xf32>, vector<32x128xf32>, vector<2x128xf32> -> vector<2x128xf32>
    %392 = arith.addf %390, %391 : vector<2x128xf32>
    %393 = vector.extract_strided_slice %392 {offsets = [0, 0], sizes = [2, 32], strides = [1, 1]} : vector<2x128xf32> to vector<2x32xf32>
    %394 = arith.negf %393 : vector<2x32xf32>
    %395 = math.exp %394 : vector<2x32xf32>
    %cst_82 = arith.constant 1.000000e+00 : f32
    %396 = vector.broadcast %cst_82 : f32 to vector<2x32xf32>
    %397 = arith.addf %396, %395 : vector<2x32xf32>
    %398 = arith.divf %396, %397 : vector<2x32xf32>
    %399 = vector.extract_strided_slice %392 {offsets = [0, 32], sizes = [2, 32], strides = [1, 1]} : vector<2x128xf32> to vector<2x32xf32>
    %400 = arith.negf %399 : vector<2x32xf32>
    %401 = math.exp %400 : vector<2x32xf32>
    %cst_83 = arith.constant 1.000000e+00 : f32
    %402 = vector.broadcast %cst_83 : f32 to vector<2x32xf32>
    %403 = arith.addf %402, %401 : vector<2x32xf32>
    %404 = arith.divf %402, %403 : vector<2x32xf32>
    %405 = vector.extract_strided_slice %392 {offsets = [0, 64], sizes = [2, 32], strides = [1, 1]} : vector<2x128xf32> to vector<2x32xf32>
    %406 = math.tanh %405 : vector<2x32xf32>
    %407 = vector.extract_strided_slice %392 {offsets = [0, 96], sizes = [2, 32], strides = [1, 1]} : vector<2x128xf32> to vector<2x32xf32>
    %408 = arith.negf %407 : vector<2x32xf32>
    %409 = math.exp %408 : vector<2x32xf32>
    %cst_84 = arith.constant 1.000000e+00 : f32
    %410 = vector.broadcast %cst_84 : f32 to vector<2x32xf32>
    %411 = arith.addf %410, %409 : vector<2x32xf32>
    %412 = arith.divf %410, %411 : vector<2x32xf32>
    %413 = arith.mulf %404, %387 : vector<2x32xf32>
    %414 = arith.mulf %398, %406 : vector<2x32xf32>
    %415 = arith.addf %413, %414 : vector<2x32xf32>
    %416 = math.tanh %415 : vector<2x32xf32>
    %417 = arith.mulf %412, %416 : vector<2x32xf32>
    %418 = vector.extract_strided_slice %247 {offsets = [12, 0], sizes = [2, 128], strides = [1, 1]} : vector<16x128xf32> to vector<2x128xf32>
    %cst_85 = arith.constant dense<0.000000e+00> : vector<2x128xf32>
    %419 = tpu.matmul %417, %243, %cst_85 {dimension_numbers = #tpu.dot_dimension_numbers<[1], [0], [0], [1], [0, 0, 1, 1], [], []>} : vector<2x32xf32>, vector<32x128xf32>, vector<2x128xf32> -> vector<2x128xf32>
    %420 = arith.addf %418, %419 : vector<2x128xf32>
    %421 = vector.extract_strided_slice %420 {offsets = [0, 0], sizes = [2, 32], strides = [1, 1]} : vector<2x128xf32> to vector<2x32xf32>
    %422 = arith.negf %421 : vector<2x32xf32>
    %423 = math.exp %422 : vector<2x32xf32>
    %cst_86 = arith.constant 1.000000e+00 : f32
    %424 = vector.broadcast %cst_86 : f32 to vector<2x32xf32>
    %425 = arith.addf %424, %423 : vector<2x32xf32>
    %426 = arith.divf %424, %425 : vector<2x32xf32>
    %427 = vector.extract_strided_slice %420 {offsets = [0, 32], sizes = [2, 32], strides = [1, 1]} : vector<2x128xf32> to vector<2x32xf32>
    %428 = arith.negf %427 : vector<2x32xf32>
    %429 = math.exp %428 : vector<2x32xf32>
    %cst_87 = arith.constant 1.000000e+00 : f32
    %430 = vector.broadcast %cst_87 : f32 to vector<2x32xf32>
    %431 = arith.addf %430, %429 : vector<2x32xf32>
    %432 = arith.divf %430, %431 : vector<2x32xf32>
    %433 = vector.extract_strided_slice %420 {offsets = [0, 64], sizes = [2, 32], strides = [1, 1]} : vector<2x128xf32> to vector<2x32xf32>
    %434 = math.tanh %433 : vector<2x32xf32>
    %435 = vector.extract_strided_slice %420 {offsets = [0, 96], sizes = [2, 32], strides = [1, 1]} : vector<2x128xf32> to vector<2x32xf32>
    %436 = arith.negf %435 : vector<2x32xf32>
    %437 = math.exp %436 : vector<2x32xf32>
    %cst_88 = arith.constant 1.000000e+00 : f32
    %438 = vector.broadcast %cst_88 : f32 to vector<2x32xf32>
    %439 = arith.addf %438, %437 : vector<2x32xf32>
    %440 = arith.divf %438, %439 : vector<2x32xf32>
    %441 = arith.mulf %432, %415 : vector<2x32xf32>
    %442 = arith.mulf %426, %434 : vector<2x32xf32>
    %443 = arith.addf %441, %442 : vector<2x32xf32>
    %444 = math.tanh %443 : vector<2x32xf32>
    %445 = arith.mulf %440, %444 : vector<2x32xf32>
    %446 = vector.extract_strided_slice %247 {offsets = [14, 0], sizes = [2, 128], strides = [1, 1]} : vector<16x128xf32> to vector<2x128xf32>
    %cst_89 = arith.constant dense<0.000000e+00> : vector<2x128xf32>
    %447 = tpu.matmul %445, %243, %cst_89 {dimension_numbers = #tpu.dot_dimension_numbers<[1], [0], [0], [1], [0, 0, 1, 1], [], []>} : vector<2x32xf32>, vector<32x128xf32>, vector<2x128xf32> -> vector<2x128xf32>
    %448 = arith.addf %446, %447 : vector<2x128xf32>
    %449 = vector.extract_strided_slice %448 {offsets = [0, 0], sizes = [2, 32], strides = [1, 1]} : vector<2x128xf32> to vector<2x32xf32>
    %450 = arith.negf %449 : vector<2x32xf32>
    %451 = math.exp %450 : vector<2x32xf32>
    %cst_90 = arith.constant 1.000000e+00 : f32
    %452 = vector.broadcast %cst_90 : f32 to vector<2x32xf32>
    %453 = arith.addf %452, %451 : vector<2x32xf32>
    %454 = arith.divf %452, %453 : vector<2x32xf32>
    %455 = vector.extract_strided_slice %448 {offsets = [0, 32], sizes = [2, 32], strides = [1, 1]} : vector<2x128xf32> to vector<2x32xf32>
    %456 = arith.negf %455 : vector<2x32xf32>
    %457 = math.exp %456 : vector<2x32xf32>
    %cst_91 = arith.constant 1.000000e+00 : f32
    %458 = vector.broadcast %cst_91 : f32 to vector<2x32xf32>
    %459 = arith.addf %458, %457 : vector<2x32xf32>
    %460 = arith.divf %458, %459 : vector<2x32xf32>
    %461 = vector.extract_strided_slice %448 {offsets = [0, 64], sizes = [2, 32], strides = [1, 1]} : vector<2x128xf32> to vector<2x32xf32>
    %462 = math.tanh %461 : vector<2x32xf32>
    %463 = vector.extract_strided_slice %448 {offsets = [0, 96], sizes = [2, 32], strides = [1, 1]} : vector<2x128xf32> to vector<2x32xf32>
    %464 = arith.negf %463 : vector<2x32xf32>
    %465 = math.exp %464 : vector<2x32xf32>
    %cst_92 = arith.constant 1.000000e+00 : f32
    %466 = vector.broadcast %cst_92 : f32 to vector<2x32xf32>
    %467 = arith.addf %466, %465 : vector<2x32xf32>
    %468 = arith.divf %466, %467 : vector<2x32xf32>
    %469 = arith.mulf %460, %443 : vector<2x32xf32>
    %470 = arith.mulf %454, %462 : vector<2x32xf32>
    %471 = arith.addf %469, %470 : vector<2x32xf32>
    %472 = math.tanh %471 : vector<2x32xf32>
    %473 = arith.mulf %468, %472 : vector<2x32xf32>
    %c0_93 = arith.constant 0 : index
    %c0_94 = arith.constant 0 : index
    %474 = vector.load %arg7[%c0_93, %c0_94] : memref<32x1xf32, #tpu.memory_space<vmem>>, vector<32x1xf32>
    %cst_95 = arith.constant dense<0.000000e+00> : vector<2x1xf32>
    %475 = tpu.matmul %473, %474, %cst_95 {dimension_numbers = #tpu.dot_dimension_numbers<[1], [0], [0], [1], [0, 0, 1, 1], [], []>} : vector<2x32xf32>, vector<32x1xf32>, vector<2x1xf32> -> vector<2x1xf32>
    %c0_96 = arith.constant 0 : index
    %c0_97 = arith.constant 0 : index
    %476 = vector.load %arg8[%c0_96, %c0_97] : memref<1x1xf32, #tpu.memory_space<vmem>>, vector<1x1xf32>
    %477 = vector.broadcast %476 : vector<1x1xf32> to vector<2x1xf32>
    %478 = arith.addf %475, %477 : vector<2x1xf32>
    %c0_98 = arith.constant 0 : index
    %c0_99 = arith.constant 0 : index
    %479 = vector.load %arg9[%c0_98, %c0_99] : memref<2x1xf32, #tpu.memory_space<vmem>>, vector<2x1xf32>
    tpu.vector_store %arg9[%c0_98, %c0_99], %478 {strides = array<i32>} : memref<2x1xf32, #tpu.memory_space<vmem>>, vector<2x1xf32>,
    return
  }
}

</mosaic_0001>

<llo_original>
// kernel: lstm_forward.1
$region0: #{lstm_forward.1}
  #allocation0 [shape = 'u32[]', space=smem, size = 0x4, offset = 0x4, fixed_abs, tag = 'smem constant byte address 0x4 - core index']
  #allocation1 [shape = 'u32[144,128]{1,0:T(1,128)}', space=vmem, size = 0x12000, scoped, tag = 'internal scratch']
  #allocation2 [shape = 'f32[16,32]{1,0:T(8,128)}', space=vmem, size = 0x2000, scoped, tag = 'scratch operand']
  #allocation3 [shape = 'f32[1,1]{1,0:T(1,128)S(1)}', space=vmem, size = 0x200, scoped, tag = 'scoped memory for lstm_forward.1']
  %s0 = inlined_call_operand.vmem [shape: f32[16,16], index: 0, kind: input, shape index: {}]
  %s1 = inlined_call_operand.hbm [shape: f32[16,128], index: 1, kind: input, shape index: {}]
  %s2 = inlined_call_operand.vmem [shape: f32[32,128], index: 2, kind: input, shape index: {}]
  %s3 = inlined_call_operand.vmem [shape: f32[1,128], index: 3, kind: input, shape index: {}]
  %s4 = inlined_call_operand.vmem [shape: f32[32,128], index: 4, kind: input, shape index: {}]
  %s5 = inlined_call_operand.hbm [shape: f32[32,128], index: 5, kind: input, shape index: {}]
  %s6 = inlined_call_operand.vmem [shape: f32[1,128], index: 6, kind: input, shape index: {}]
  %s7 = inlined_call_operand.vmem [shape: f32[32,1], index: 7, kind: input, shape index: {}]
  %s8 = inlined_call_operand.<no memory space> [shape: f32[1,1], index: 8, kind: input, shape index: {}]
  %s9 = inlined_call_operand.vmem [shape: f32[2,1], index: 9, kind: output, shape index: {}]
  %s10 = sld [smem:[#allocation0]]
  $region54: #{lstm_forward.1} parent=0
    _
  %s12 = ssub.s32 1, %s10
  %s13 = scalar_select 0, %s12, %s10
  %v14 = vstv %s8
  %15 = vst [vmem:[#allocation3] sm:$0x1] %v14
  $region1: #{lstm_forward.1} parent=0
    #allocation4 [shape = 'u8[8192]{0}', space=vmem, size = 0x2000, scoped, tag = 'input window, operand 1, single buffered']
    #allocation5 [shape = 's32[1]{0}', space=sflag, size = 0x4, scoped, tag = 'scoped memory for lstm_forward.1']
    #allocation6 [shape = 'u8[16384]{0}', space=vmem, size = 0x4000, scoped, tag = 'input window, operand 5, single buffered']
    #allocation7 [shape = 's32[1]{0}', space=sflag, size = 0x4, scoped, tag = 'scoped memory for lstm_forward.1']
    %16 = vsyncpa [#allocation5], 0
    %17 = vsyncpa [#allocation7], 0
    // Predicated region
    $region2: #{lstm_forward.1} parent=1 // pred_check
      _
    $region3: #{lstm_forward.1} parent=1 // pred_check_branch
      %19 = sbr.rel (0) target = $region5
    $region4: #{lstm_forward.1} parent=1 // pred_region
      _
    $region5: #{lstm_forward.1} parent=1 // pred_fallthru
      _
    // Predicated region
    $region6: #{lstm_forward.1} parent=1 // pred_check
      _
    $region7: #{lstm_forward.1} parent=1 // pred_check_branch
      %21 = sbr.rel (0) target = $region9
    $region8: #{lstm_forward.1} parent=1 // pred_region
      %s23 = ssub.s32 256, 256
      %24 = vsyncadd [#allocation5], %s23
      %s25 = sshll.u32 [#allocation4], 4
      %s26 = int_to_ptr.vmem [resolvable:$true] %s25
      %31 = dma.hbm_to_vmem [thread:$0]  %s1, 256, %s26, [#allocation5], 128, 128, 8
    $region9: #{lstm_forward.1} parent=1 // pred_fallthru
      _
    // Predicated region
    $region10: #{lstm_forward.1} parent=1 // pred_check
      _
    $region11: #{lstm_forward.1} parent=1 // pred_check_branch
      %33 = sbr.rel (0) target = $region13
    $region12: #{lstm_forward.1} parent=1 // pred_region
      _
    $region13: #{lstm_forward.1} parent=1 // pred_fallthru
      _
    // Predicated region
    $region14: #{lstm_forward.1} parent=1 // pred_check
      _
    $region15: #{lstm_forward.1} parent=1 // pred_check_branch
      %35 = sbr.rel (0) target = $region17
    $region16: #{lstm_forward.1} parent=1 // pred_region
      _
    $region17: #{lstm_forward.1} parent=1 // pred_fallthru
      _
    // Predicated region
    $region18: #{lstm_forward.1} parent=1 // pred_check
      _
    $region19: #{lstm_forward.1} parent=1 // pred_check_branch
      %37 = sbr.rel (0) target = $region21
    $region20: #{lstm_forward.1} parent=1 // pred_region
      _
    $region21: #{lstm_forward.1} parent=1 // pred_fallthru
      _
    // Predicated region
    $region22: #{lstm_forward.1} parent=1 // pred_check
      _
    $region23: #{lstm_forward.1} parent=1 // pred_check_branch
      %39 = sbr.rel (0) target = $region25
    $region24: #{lstm_forward.1} parent=1 // pred_region
      %s41 = ssub.s32 512, 512
      %42 = vsyncadd [#allocation7], %s41
      %s43 = sshll.u32 [#allocation6], 4
      %s44 = int_to_ptr.vmem [resolvable:$true] %s43
      %49 = dma.hbm_to_vmem [thread:$0]  %s5, 512, %s44, [#allocation7], 128, 128, 8
    $region25: #{lstm_forward.1} parent=1 // pred_fallthru
      _
    // Predicated region
    $region26: #{lstm_forward.1} parent=1 // pred_check
      _
    $region27: #{lstm_forward.1} parent=1 // pred_check_branch
      %51 = sbr.rel (0) target = $region29
    $region28: #{lstm_forward.1} parent=1 // pred_region
      _
    $region29: #{lstm_forward.1} parent=1 // pred_fallthru
      _
    // Predicated region
    $region30: #{lstm_forward.1} parent=1 // pred_check
      _
    $region31: #{lstm_forward.1} parent=1 // pred_check_branch
      %53 = sbr.rel (0) target = $region33
    $region32: #{lstm_forward.1} parent=1 // pred_region
      _
    $region33: #{lstm_forward.1} parent=1 // pred_fallthru
      _
    // Predicated region
    $region34: #{lstm_forward.1} parent=1 // pred_check
      _
    $region35: #{lstm_forward.1} parent=1 // pred_check_branch
      %55 = sbr.rel (0) target = $region37
    $region36: #{lstm_forward.1} parent=1 // pred_region
      _
    $region37: #{lstm_forward.1} parent=1 // pred_fallthru
      _
    // Predicated region
    $region38: #{lstm_forward.1} parent=1 // pred_check
      _
    $region39: #{lstm_forward.1} parent=1 // pred_check_branch
      %57 = sbr.rel (0) target = $region41
    $region40: #{lstm_forward.1} parent=1 // pred_region
      %58 = dma.done [#allocation5], 256
    $region41: #{lstm_forward.1} parent=1 // pred_fallthru
      _
    // Predicated region
    $region42: #{lstm_forward.1} parent=1 // pred_check
      _
    $region43: #{lstm_forward.1} parent=1 // pred_check_branch
      %60 = sbr.rel (0) target = $region45
    $region44: #{lstm_forward.1} parent=1 // pred_region
      %61 = dma.done [#allocation7], 512
    $region45: #{lstm_forward.1} parent=1 // pred_fallthru
      _
    %v62 = vld [vmem:[%s0] sm:$0xff]
    %v63 = vld [vmem:[%s0 + $0x8] sm:$0xff]
    %v64 = vld [vmem:[#allocation4] sm:$0xff]
    %v65 = vld [vmem:[#allocation4 + $0x8] sm:$0xff]
    %v66 = vld [vmem:[%s2] sm:$0xff]
    %v67 = vld [vmem:[%s2 + $0x8] sm:$0xff]
    %v68 = vld [vmem:[%s2 + $0x10] sm:$0xff]
    %v69 = vld [vmem:[%s2 + $0x18] sm:$0xff]
    %v70 = vld [vmem:[%s3] sm:$0x1]
    %v72 = vlaneseq
    %v73 = vshrl.u32 %v72, 7
    %v74 = vsub.s32 0, %v73
    %v75 = vrot.slane %v70, %v74
    %vm77 = vcmask 130048
    %v79 = vsel %vm77, %v62, 0
    %v82 = vsel %vm77, %v63, 0
    %84 = vmatprep.subr.mxu0 0.0
    %85 = vmatpush1.msra.mxu0 0.0
    %86 = vmatprep.subr.mxu0 0.0
    %87 = vmatpush1.msra.mxu0 0.0
    %88 = vmatprep.subr.mxu0 0.0
    %89 = vmatpush1.msra.mxu0 0.0
    %90 = vmatprep.subr.mxu0 0.0
    %91 = vmatpush1.msra.mxu0 0.0
    %92 = vmatprep.subr.mxu0 0.0
    %93 = vmatpush1.msra.mxu0 0.0
    %94 = vmatprep.subr.mxu0 0.0
    %95 = vmatpush1.msra.mxu0 0.0
    %96 = vmatprep.subr.mxu0 0.0
    %97 = vmatpush1.msra.mxu0 0.0
    %98 = vmatprep.subr.mxu0 0.0
    %99 = vmatpush1.msra.mxu0 0.0
    %100 = vmatprep.subr.mxu0 0.0
    %101 = vmatpush1.msra.mxu0 0.0
    %102 = vmatprep.subr.mxu0 0.0
    %103 = vmatpush1.msra.mxu0 0.0
    %104 = vmatprep.subr.mxu0 0.0
    %105 = vmatpush1.msra.mxu0 0.0
    %106 = vmatprep.subr.mxu0 0.0
    %107 = vmatpush1.msra.mxu0 0.0
    %108 = vmatprep.subr.mxu0 0.0
    %109 = vmatpush1.msra.mxu0 0.0
    %110 = vmatprep.subr.mxu0 0.0
    %111 = vmatpush1.msra.mxu0 0.0
    %112 = vmatprep.subr.mxu0 0.0
    %113 = vmatpush1.msra.mxu0 %v65
    %114 = vmatprep.subr.mxu0 0.0
    %115 = vmatpush1.msra.mxu0 %v64
    %116 = vmatprep.subr.mxu0 0.0
    %117 = vmatpush2.msra.mxu0 0.0
    %118 = vmatprep.subr.mxu0 0.0
    %119 = vmatpush2.msra.mxu0 0.0
    %120 = vmatprep.subr.mxu0 0.0
    %121 = vmatpush2.msra.mxu0 0.0
    %122 = vmatprep.subr.mxu0 0.0
    %123 = vmatpush2.msra.mxu0 0.0
    %124 = vmatprep.subr.mxu0 0.0
    %125 = vmatpush2.msra.mxu0 0.0
    %126 = vmatprep.subr.mxu0 0.0
    %127 = vmatpush2.msra.mxu0 0.0
    %128 = vmatprep.subr.mxu0 0.0
    %129 = vmatpush2.msra.mxu0 0.0
    %130 = vmatprep.subr.mxu0 0.0
    %131 = vmatpush2.msra.mxu0 0.0
    %132 = vmatprep.subr.mxu0 0.0
    %133 = vmatpush2.msra.mxu0 0.0
    %134 = vmatprep.subr.mxu0 0.0
    %135 = vmatpush2.msra.mxu0 0.0
    %136 = vmatprep.subr.mxu0 0.0
    %137 = vmatpush2.msra.mxu0 0.0
    %138 = vmatprep.subr.mxu0 0.0
    %139 = vmatpush2.msra.mxu0 0.0
    %140 = vmatprep.subr.mxu0 0.0
    %141 = vmatpush2.msra.mxu0 0.0
    %142 = vmatprep.subr.mxu0 0.0
    %143 = vmatpush2.msra.mxu0 0.0
    %144 = vmatprep.subr.mxu0 0.0
    %145 = vmatpush2.msra.mxu0 0.0
    %146 = vmatprep.subr.mxu0 0.0
    %147 = vmatpush2.msra.mxu0 0.0
    %148 = vmatprep.mubr.f32.mxu0 0.0
    %149 = vmatmul.mubr.f32.gmra.mxu0 %v79
    %v150 = vpop.f32.mrf.mxu0
    %v151 = vadd.f32 %v75, %v150
    %v152 = vpop.f32.mrf.mxu0
    %153 = vmatprep.mubr.f32.mxu0 0.0
    %154 = vmatmul.mubr.f32.gmra.mxu0 %v82
    %v155 = vpop.f32.mrf.mxu0
    %v156 = vadd.f32 %v75, %v155
    %v157 = vpop.f32.mrf.mxu0
    %158 = vdwg.mxu0
    %vm159 = vcmask 261120
    %v161 = vsel %vm159, 0.0, 0
    %163 = vmatprep.subr.mxu0 0.0
    %164 = vmatpush1.msra.mxu0 0.0
    %165 = vmatprep.subr.mxu0 0.0
    %166 = vmatpush1.msra.mxu0 0.0
    %167 = vmatprep.subr.mxu0 0.0
    %168 = vmatpush1.msra.mxu0 0.0
    %169 = vmatprep.subr.mxu0 0.0
    %170 = vmatpush1.msra.mxu0 0.0
    %171 = vmatprep.subr.mxu0 0.0
    %172 = vmatpush1.msra.mxu0 0.0
    %173 = vmatprep.subr.mxu0 0.0
    %174 = vmatpush1.msra.mxu0 0.0
    %175 = vmatprep.subr.mxu0 0.0
    %176 = vmatpush1.msra.mxu0 0.0
    %177 = vmatprep.subr.mxu0 0.0
    %178 = vmatpush1.msra.mxu0 0.0
    %179 = vmatprep.subr.mxu0 0.0
    %180 = vmatpush1.msra.mxu0 0.0
    %181 = vmatprep.subr.mxu0 0.0
    %182 = vmatpush1.msra.mxu0 0.0
    %183 = vmatprep.subr.mxu0 0.0
    %184 = vmatpush1.msra.mxu0 0.0
    %185 = vmatprep.subr.mxu0 0.0
    %186 = vmatpush1.msra.mxu0 0.0
    %187 = vmatprep.subr.mxu0 0.0
    %188 = vmatpush1.msra.mxu0 %v69
    %189 = vmatprep.subr.mxu0 0.0
    %190 = vmatpush1.msra.mxu0 %v68
    %191 = vmatprep.subr.mxu0 0.0
    %192 = vmatpush1.msra.mxu0 %v67
    %193 = vmatprep.subr.mxu0 0.0
    %194 = vmatpush1.msra.mxu0 %v66
    %195 = vmatprep.subr.mxu0 0.0
    %196 = vmatpush2.msra.mxu0 0.0
    %197 = vmatprep.subr.mxu0 0.0
    %198 = vmatpush2.msra.mxu0 0.0
    %199 = vmatprep.subr.mxu0 0.0
    %200 = vmatpush2.msra.mxu0 0.0
    %201 = vmatprep.subr.mxu0 0.0
    %202 = vmatpush2.msra.mxu0 0.0
    %203 = vmatprep.subr.mxu0 0.0
    %204 = vmatpush2.msra.mxu0 0.0
    %205 = vmatprep.subr.mxu0 0.0
    %206 = vmatpush2.msra.mxu0 0.0
    %207 = vmatprep.subr.mxu0 0.0
    %208 = vmatpush2.msra.mxu0 0.0
    %209 = vmatprep.subr.mxu0 0.0
    %210 = vmatpush2.msra.mxu0 0.0
    %211 = vmatprep.subr.mxu0 0.0
    %212 = vmatpush2.msra.mxu0 0.0
    %213 = vmatprep.subr.mxu0 0.0
    %214 = vmatpush2.msra.mxu0 0.0
    %215 = vmatprep.subr.mxu0 0.0
    %216 = vmatpush2.msra.mxu0 0.0
    %217 = vmatprep.subr.mxu0 0.0
    %218 = vmatpush2.msra.mxu0 0.0
    %219 = vmatprep.subr.mxu0 0.0
    %220 = vmatpush2.msra.mxu0 0.0
    %221 = vmatprep.subr.mxu0 0.0
    %222 = vmatpush2.msra.mxu0 0.0
    %223 = vmatprep.subr.mxu0 0.0
    %224 = vmatpush2.msra.mxu0 0.0
    %225 = vmatprep.subr.mxu0 0.0
    %226 = vmatpush2.msra.mxu0 0.0
    %227 = vmatprep.mubr.f32.mxu0 0.0
    %228 = vmatmul.mubr.f32.gmra.mxu0 %v161
    %v229 = vpop.f32.mrf.mxu0
    %v230 = vadd.f32 0.0, %v229
    %v231 = vpop.f32.mrf.mxu0
    %232 = vdwg.mxu0
    %v233 = vadd.f32 %v151, %v230
    %v234 = vxor.u32 %v233, 2147483648
    %v235 = vmul.f32 %v234, 1.442695
    %v236 = vpow.pop %v235
    %v237 = vadd.f32 %v236, 1.0
    %v238 = vrcp.pop %v237
    %v239 = vmul.f32 1.0, %v238
    %v240 = vtanh.pop %v233
    %v241 = vmul.f32 %v239, 0.0
    %243 = vrot.lane.b32.xlu0 %v240, 64
    %v244 = vpop.permute.xlu0 %243
    %v246 = vmul.f32 %v239, %v244
    %248 = vrot.lane.b32.xlu0 %v246, 32
    %v249 = vpop.permute.xlu0 %248
    %v251 = vadd.f32 %v241, %v249
    %v252 = vtanh.pop %v251
    %254 = vrot.lane.b32.xlu0 %v252, 64
    %v255 = vpop.permute.xlu0 %254
    %v257 = vmul.f32 %v239, %v255
    %259 = vrot.lane.b32.xlu0 %v257, 32
    %v260 = vpop.permute.xlu0 %259
    %vm262 = vcmask 254976
    %263 = vst.msk [vmem:[#allocation2] sm:$0x3] %vm262, %v260
    %v264 = vsel %vm159, %v260, 0
    %266 = vmatprep.subr.mxu0 0.0
    %267 = vmatpush1.msra.mxu0 0.0
    %268 = vmatprep.subr.mxu0 0.0
    %269 = vmatpush1.msra.mxu0 0.0
    %270 = vmatprep.subr.mxu0 0.0
    %271 = vmatpush1.msra.mxu0 0.0
    %272 = vmatprep.subr.mxu0 0.0
    %273 = vmatpush1.msra.mxu0 0.0
    %274 = vmatprep.subr.mxu0 0.0
    %275 = vmatpush1.msra.mxu0 0.0
    %276 = vmatprep.subr.mxu0 0.0
    %277 = vmatpush1.msra.mxu0 0.0
    %278 = vmatprep.subr.mxu0 0.0
    %279 = vmatpush1.msra.mxu0 0.0
    %280 = vmatprep.subr.mxu0 0.0
    %281 = vmatpush1.msra.mxu0 0.0
    %282 = vmatprep.subr.mxu0 0.0
    %283 = vmatpush1.msra.mxu0 0.0
    %284 = vmatprep.subr.mxu0 0.0
    %285 = vmatpush1.msra.mxu0 0.0
    %286 = vmatprep.subr.mxu0 0.0
    %287 = vmatpush1.msra.mxu0 0.0
    %288 = vmatprep.subr.mxu0 0.0
    %289 = vmatpush1.msra.mxu0 0.0
    %290 = vmatprep.subr.mxu0 0.0
    %291 = vmatpush1.msra.mxu0 %v69
    %292 = vmatprep.subr.mxu0 0.0
    %293 = vmatpush1.msra.mxu0 %v68
    %294 = vmatprep.subr.mxu0 0.0
    %295 = vmatpush1.msra.mxu0 %v67
    %296 = vmatprep.subr.mxu0 0.0
    %297 = vmatpush1.msra.mxu0 %v66
    %298 = vmatprep.subr.mxu0 0.0
    %299 = vmatpush2.msra.mxu0 0.0
    %300 = vmatprep.subr.mxu0 0.0
    %301 = vmatpush2.msra.mxu0 0.0
    %302 = vmatprep.subr.mxu0 0.0
    %303 = vmatpush2.msra.mxu0 0.0
    %304 = vmatprep.subr.mxu0 0.0
    %305 = vmatpush2.msra.mxu0 0.0
    %306 = vmatprep.subr.mxu0 0.0
    %307 = vmatpush2.msra.mxu0 0.0
    %308 = vmatprep.subr.mxu0 0.0
    %309 = vmatpush2.msra.mxu0 0.0
    %310 = vmatprep.subr.mxu0 0.0
    %311 = vmatpush2.msra.mxu0 0.0
    %312 = vmatprep.subr.mxu0 0.0
    %313 = vmatpush2.msra.mxu0 0.0
    %314 = vmatprep.subr.mxu0 0.0
    %315 = vmatpush2.msra.mxu0 0.0
    %316 = vmatprep.subr.mxu0 0.0
    %317 = vmatpush2.msra.mxu0 0.0
    %318 = vmatprep.subr.mxu0 0.0
    %319 = vmatpush2.msra.mxu0 0.0
    %320 = vmatprep.subr.mxu0 0.0
    %321 = vmatpush2.msra.mxu0 0.0
    %322 = vmatprep.subr.mxu0 0.0
    %323 = vmatpush2.msra.mxu0 0.0
    %324 = vmatprep.subr.mxu0 0.0
    %325 = vmatpush2.msra.mxu0 0.0
    %326 = vmatprep.subr.mxu0 0.0
    %327 = vmatpush2.msra.mxu0 0.0
    %328 = vmatprep.subr.mxu0 0.0
    %329 = vmatpush2.msra.mxu0 0.0
    %330 = vmatprep.mubr.f32.mxu0 0.0
    %331 = vmatmul.mubr.f32.gmra.mxu0 %v264
    %v332 = vpop.f32.mrf.mxu0
    %v333 = vadd.f32 0.0, %v332
    %v334 = vpop.f32.mrf.mxu0
    %335 = vdwg.mxu0
    %v337 = vrot.slane %v333, 6
    %v339 = vadd.f32 %v151, %v337
    %v340 = vxor.u32 %v339, 2147483648
    %v341 = vmul.f32 %v340, 1.442695
    %v342 = vpow.pop %v341
    %v343 = vadd.f32 %v342, 1.0
    %v344 = vrcp.pop %v343
    %v345 = vmul.f32 1.0, %v344
    %v346 = vtanh.pop %v339
    %v348 = vrot.slane %v251, 6
    %v350 = vmul.f32 %v345, %v348
    %352 = vrot.lane.b32.xlu0 %v346, 64
    %v353 = vpop.permute.xlu0 %352
    %v355 = vmul.f32 %v345, %v353
    %357 = vrot.lane.b32.xlu0 %v355, 32
    %v358 = vpop.permute.xlu0 %357
    %v360 = vadd.f32 %v350, %v358
    %v361 = vtanh.pop %v360
    %363 = vrot.lane.b32.xlu0 %v361, 64
    %v364 = vpop.permute.xlu0 %363
    %v366 = vmul.f32 %v345, %v364
    %368 = vrot.lane.b32.xlu0 %v366, 32
    %v369 = vpop.permute.xlu0 %368
    %vm371 = vcmask 257026
    %372 = vst.msk [vmem:[#allocation2] sm:$0xc] %vm371, %v369
    %v373 = vrot.slane %v366, 2
    %374 = vrot.lane.b32.xlu0 %v373, 32
    %v375 = vpop.permute.xlu0 %374
    %v376 = vsel %vm159, %v375, 0
    %378 = vmatprep.subr.mxu0 0.0
    %379 = vmatpush1.msra.mxu0 0.0
    %380 = vmatprep.subr.mxu0 0.0
    %381 = vmatpush1.msra.mxu0 0.0
    %382 = vmatprep.subr.mxu0 0.0
    %383 = vmatpush1.msra.mxu0 0.0
    %384 = vmatprep.subr.mxu0 0.0
    %385 = vmatpush1.msra.mxu0 0.0
    %386 = vmatprep.subr.mxu0 0.0
    %387 = vmatpush1.msra.mxu0 0.0
    %388 = vmatprep.subr.mxu0 0.0
    %389 = vmatpush1.msra.mxu0 0.0
    %390 = vmatprep.subr.mxu0 0.0
    %391 = vmatpush1.msra.mxu0 0.0
    %392 = vmatprep.subr.mxu0 0.0
    %393 = vmatpush1.msra.mxu0 0.0
    %394 = vmatprep.subr.mxu0 0.0
    %395 = vmatpush1.msra.mxu0 0.0
    %396 = vmatprep.subr.mxu0 0.0
    %397 = vmatpush1.msra.mxu0 0.0
    %398 = vmatprep.subr.mxu0 0.0
    %399 = vmatpush1.msra.mxu0 0.0
    %400 = vmatprep.subr.mxu0 0.0
    %401 = vmatpush1.msra.mxu0 0.0
    %402 = vmatprep.subr.mxu0 0.0
    %403 = vmatpush1.msra.mxu0 %v69
    %404 = vmatprep.subr.mxu0 0.0
    %405 = vmatpush1.msra.mxu0 %v68
    %406 = vmatprep.subr.mxu0 0.0
    %407 = vmatpush1.msra.mxu0 %v67
    %408 = vmatprep.subr.mxu0 0.0
    %409 = vmatpush1.msra.mxu0 %v66
    %410 = vmatprep.subr.mxu0 0.0
    %411 = vmatpush2.msra.mxu0 0.0
    %412 = vmatprep.subr.mxu0 0.0
    %413 = vmatpush2.msra.mxu0 0.0
    %414 = vmatprep.subr.mxu0 0.0
    %415 = vmatpush2.msra.mxu0 0.0
    %416 = vmatprep.subr.mxu0 0.0
    %417 = vmatpush2.msra.mxu0 0.0
    %418 = vmatprep.subr.mxu0 0.0
    %419 = vmatpush2.msra.mxu0 0.0
    %420 = vmatprep.subr.mxu0 0.0
    %421 = vmatpush2.msra.mxu0 0.0
    %422 = vmatprep.subr.mxu0 0.0
    %423 = vmatpush2.msra.mxu0 0.0
    %424 = vmatprep.subr.mxu0 0.0
    %425 = vmatpush2.msra.mxu0 0.0
    %426 = vmatprep.subr.mxu0 0.0
    %427 = vmatpush2.msra.mxu0 0.0
    %428 = vmatprep.subr.mxu0 0.0
    %429 = vmatpush2.msra.mxu0 0.0
    %430 = vmatprep.subr.mxu0 0.0
    %431 = vmatpush2.msra.mxu0 0.0
    %432 = vmatprep.subr.mxu0 0.0
    %433 = vmatpush2.msra.mxu0 0.0
    %434 = vmatprep.subr.mxu0 0.0
    %435 = vmatpush2.msra.mxu0 0.0
    %436 = vmatprep.subr.mxu0 0.0
    %437 = vmatpush2.msra.mxu0 0.0
    %438 = vmatprep.subr.mxu0 0.0
    %439 = vmatpush2.msra.mxu0 0.0
    %440 = vmatprep.subr.mxu0 0.0
    %441 = vmatpush2.msra.mxu0 0.0
    %442 = vmatprep.mubr.f32.mxu0 0.0
    %443 = vmatmul.mubr.f32.gmra.mxu0 %v376
    %v444 = vpop.f32.mrf.mxu0
    %v445 = vadd.f32 0.0, %v444
    %v446 = vpop.f32.mrf.mxu0
    %447 = vdwg.mxu0
    %v449 = vrot.slane %v445, 4
    %v451 = vadd.f32 %v151, %v449
    %v452 = vxor.u32 %v451, 2147483648
    %v453 = vmul.f32 %v452, 1.442695
    %v454 = vpow.pop %v453
    %v455 = vadd.f32 %v454, 1.0
    %v456 = vrcp.pop %v455
    %v457 = vmul.f32 1.0, %v456
    %v458 = vtanh.pop %v451
    %v460 = vrot.slane %v360, 6
    %v462 = vmul.f32 %v457, %v460
    %464 = vrot.lane.b32.xlu0 %v458, 64
    %v465 = vpop.permute.xlu0 %464
    %v467 = vmul.f32 %v457, %v465
    %469 = vrot.lane.b32.xlu0 %v467, 32
    %v470 = vpop.permute.xlu0 %469
    %v472 = vadd.f32 %v462, %v470
    %v473 = vtanh.pop %v472
    %475 = vrot.lane.b32.xlu0 %v473, 64
    %v476 = vpop.permute.xlu0 %475
    %v478 = vmul.f32 %v457, %v476
    %480 = vrot.lane.b32.xlu0 %v478, 32
    %v481 = vpop.permute.xlu0 %480
    %vm483 = vcmask 259076
    %484 = vst.msk [vmem:[#allocation2] sm:$0x30] %vm483, %v481
    %v485 = vrot.slane %v478, 4
    %486 = vrot.lane.b32.xlu0 %v485, 32
    %v487 = vpop.permute.xlu0 %486
    %v488 = vsel %vm159, %v487, 0
    %490 = vmatprep.subr.mxu0 0.0
    %491 = vmatpush1.msra.mxu0 0.0
    %492 = vmatprep.subr.mxu0 0.0
    %493 = vmatpush1.msra.mxu0 0.0
    %494 = vmatprep.subr.mxu0 0.0
    %495 = vmatpush1.msra.mxu0 0.0
    %496 = vmatprep.subr.mxu0 0.0
    %497 = vmatpush1.msra.mxu0 0.0
    %498 = vmatprep.subr.mxu0 0.0
    %499 = vmatpush1.msra.mxu0 0.0
    %500 = vmatprep.subr.mxu0 0.0
    %501 = vmatpush1.msra.mxu0 0.0
    %502 = vmatprep.subr.mxu0 0.0
    %503 = vmatpush1.msra.mxu0 0.0
    %504 = vmatprep.subr.mxu0 0.0
    %505 = vmatpush1.msra.mxu0 0.0
    %506 = vmatprep.subr.mxu0 0.0
    %507 = vmatpush1.msra.mxu0 0.0
    %508 = vmatprep.subr.mxu0 0.0
    %509 = vmatpush1.msra.mxu0 0.0
    %510 = vmatprep.subr.mxu0 0.0
    %511 = vmatpush1.msra.mxu0 0.0
    %512 = vmatprep.subr.mxu0 0.0
    %513 = vmatpush1.msra.mxu0 0.0
    %514 = vmatprep.subr.mxu0 0.0
    %515 = vmatpush1.msra.mxu0 %v69
    %516 = vmatprep.subr.mxu0 0.0
    %517 = vmatpush1.msra.mxu0 %v68
    %518 = vmatprep.subr.mxu0 0.0
    %519 = vmatpush1.msra.mxu0 %v67
    %520 = vmatprep.subr.mxu0 0.0
    %521 = vmatpush1.msra.mxu0 %v66
    %522 = vmatprep.subr.mxu0 0.0
    %523 = vmatpush2.msra.mxu0 0.0
    %524 = vmatprep.subr.mxu0 0.0
    %525 = vmatpush2.msra.mxu0 0.0
    %526 = vmatprep.subr.mxu0 0.0
    %527 = vmatpush2.msra.mxu0 0.0
    %528 = vmatprep.subr.mxu0 0.0
    %529 = vmatpush2.msra.mxu0 0.0
    %530 = vmatprep.subr.mxu0 0.0
    %531 = vmatpush2.msra.mxu0 0.0
    %532 = vmatprep.subr.mxu0 0.0
    %533 = vmatpush2.msra.mxu0 0.0
    %534 = vmatprep.subr.mxu0 0.0
    %535 = vmatpush2.msra.mxu0 0.0
    %536 = vmatprep.subr.mxu0 0.0
    %537 = vmatpush2.msra.mxu0 0.0
    %538 = vmatprep.subr.mxu0 0.0
    %539 = vmatpush2.msra.mxu0 0.0
    %540 = vmatprep.subr.mxu0 0.0
    %541 = vmatpush2.msra.mxu0 0.0
    %542 = vmatprep.subr.mxu0 0.0
    %543 = vmatpush2.msra.mxu0 0.0
    %544 = vmatprep.subr.mxu0 0.0
    %545 = vmatpush2.msra.mxu0 0.0
    %546 = vmatprep.subr.mxu0 0.0
    %547 = vmatpush2.msra.mxu0 0.0
    %548 = vmatprep.subr.mxu0 0.0
    %549 = vmatpush2.msra.mxu0 0.0
    %550 = vmatprep.subr.mxu0 0.0
    %551 = vmatpush2.msra.mxu0 0.0
    %552 = vmatprep.subr.mxu0 0.0
    %553 = vmatpush2.msra.mxu0 0.0
    %554 = vmatprep.mubr.f32.mxu0 0.0
    %555 = vmatmul.mubr.f32.gmra.mxu0 %v488
    %v556 = vpop.f32.mrf.mxu0
    %v557 = vadd.f32 0.0, %v556
    %v558 = vpop.f32.mrf.mxu0
    %559 = vdwg.mxu0
    %v561 = vrot.slane %v557, 2
    %v563 = vadd.f32 %v151, %v561
    %v564 = vxor.u32 %v563, 2147483648
    %v565 = vmul.f32 %v564, 1.442695
    %v566 = vpow.pop %v565
    %v567 = vadd.f32 %v566, 1.0
    %v568 = vrcp.pop %v567
    %v569 = vmul.f32 1.0, %v568
    %v570 = vtanh.pop %v563
    %v572 = vrot.slane %v472, 6
    %v574 = vmul.f32 %v569, %v572
    %576 = vrot.lane.b32.xlu0 %v570, 64
    %v577 = vpop.permute.xlu0 %576
    %v579 = vmul.f32 %v569, %v577
    %581 = vrot.lane.b32.xlu0 %v579, 32
    %v582 = vpop.permute.xlu0 %581
    %v584 = vadd.f32 %v574, %v582
    %v585 = vtanh.pop %v584
    %587 = vrot.lane.b32.xlu0 %v585, 64
    %v588 = vpop.permute.xlu0 %587
    %v590 = vmul.f32 %v569, %v588
    %592 = vrot.lane.b32.xlu0 %v590, 32
    %v593 = vpop.permute.xlu0 %592
    %vm595 = vcmask 261126
    %596 = vst.msk [vmem:[#allocation2] sm:$0xc0] %vm595, %v593
    %v597 = vrot.slane %v590, 6
    %598 = vrot.lane.b32.xlu0 %v597, 32
    %v599 = vpop.permute.xlu0 %598
    %v600 = vsel %vm159, %v599, 0
    %602 = vmatprep.subr.mxu0 0.0
    %603 = vmatpush1.msra.mxu0 0.0
    %604 = vmatprep.subr.mxu0 0.0
    %605 = vmatpush1.msra.mxu0 0.0
    %606 = vmatprep.subr.mxu0 0.0
    %607 = vmatpush1.msra.mxu0 0.0
    %608 = vmatprep.subr.mxu0 0.0
    %609 = vmatpush1.msra.mxu0 0.0
    %610 = vmatprep.subr.mxu0 0.0
    %611 = vmatpush1.msra.mxu0 0.0
    %612 = vmatprep.subr.mxu0 0.0
    %613 = vmatpush1.msra.mxu0 0.0
    %614 = vmatprep.subr.mxu0 0.0
    %615 = vmatpush1.msra.mxu0 0.0
    %616 = vmatprep.subr.mxu0 0.0
    %617 = vmatpush1.msra.mxu0 0.0
    %618 = vmatprep.subr.mxu0 0.0
    %619 = vmatpush1.msra.mxu0 0.0
    %620 = vmatprep.subr.mxu0 0.0
    %621 = vmatpush1.msra.mxu0 0.0
    %622 = vmatprep.subr.mxu0 0.0
    %623 = vmatpush1.msra.mxu0 0.0
    %624 = vmatprep.subr.mxu0 0.0
    %625 = vmatpush1.msra.mxu0 0.0
    %626 = vmatprep.subr.mxu0 0.0
    %627 = vmatpush1.msra.mxu0 %v69
    %628 = vmatprep.subr.mxu0 0.0
    %629 = vmatpush1.msra.mxu0 %v68
    %630 = vmatprep.subr.mxu0 0.0
    %631 = vmatpush1.msra.mxu0 %v67
    %632 = vmatprep.subr.mxu0 0.0
    %633 = vmatpush1.msra.mxu0 %v66
    %634 = vmatprep.subr.mxu0 0.0
    %635 = vmatpush2.msra.mxu0 0.0
    %636 = vmatprep.subr.mxu0 0.0
    %637 = vmatpush2.msra.mxu0 0.0
    %638 = vmatprep.subr.mxu0 0.0
    %639 = vmatpush2.msra.mxu0 0.0
    %640 = vmatprep.subr.mxu0 0.0
    %641 = vmatpush2.msra.mxu0 0.0
    %642 = vmatprep.subr.mxu0 0.0
    %643 = vmatpush2.msra.mxu0 0.0
    %644 = vmatprep.subr.mxu0 0.0
    %645 = vmatpush2.msra.mxu0 0.0
    %646 = vmatprep.subr.mxu0 0.0
    %647 = vmatpush2.msra.mxu0 0.0
    %648 = vmatprep.subr.mxu0 0.0
    %649 = vmatpush2.msra.mxu0 0.0
    %650 = vmatprep.subr.mxu0 0.0
    %651 = vmatpush2.msra.mxu0 0.0
    %652 = vmatprep.subr.mxu0 0.0
    %653 = vmatpush2.msra.mxu0 0.0
    %654 = vmatprep.subr.mxu0 0.0
    %655 = vmatpush2.msra.mxu0 0.0
    %656 = vmatprep.subr.mxu0 0.0
    %657 = vmatpush2.msra.mxu0 0.0
    %658 = vmatprep.subr.mxu0 0.0
    %659 = vmatpush2.msra.mxu0 0.0
    %660 = vmatprep.subr.mxu0 0.0
    %661 = vmatpush2.msra.mxu0 0.0
    %662 = vmatprep.subr.mxu0 0.0
    %663 = vmatpush2.msra.mxu0 0.0
    %664 = vmatprep.subr.mxu0 0.0
    %665 = vmatpush2.msra.mxu0 0.0
    %666 = vmatprep.mubr.f32.mxu0 0.0
    %667 = vmatmul.mubr.f32.gmra.mxu0 %v600
    %v668 = vpop.f32.mrf.mxu0
    %v669 = vadd.f32 0.0, %v668
    %v670 = vpop.f32.mrf.mxu0
    %671 = vdwg.mxu0
    %v672 = vadd.f32 %v156, %v669
    %v673 = vxor.u32 %v672, 2147483648
    %v674 = vmul.f32 %v673, 1.442695
    %v675 = vpow.pop %v674
    %v676 = vadd.f32 %v675, 1.0
    %v677 = vrcp.pop %v676
    %v678 = vmul.f32 1.0, %v677
    %v679 = vtanh.pop %v672
    %v681 = vrot.slane %v584, 6
    %v683 = vmul.f32 %v678, %v681
    %685 = vrot.lane.b32.xlu0 %v679, 64
    %v686 = vpop.permute.xlu0 %685
    %v688 = vmul.f32 %v678, %v686
    %690 = vrot.lane.b32.xlu0 %v688, 32
    %v691 = vpop.permute.xlu0 %690
    %v693 = vadd.f32 %v683, %v691
    %v694 = vtanh.pop %v693
    %696 = vrot.lane.b32.xlu0 %v694, 64
    %v697 = vpop.permute.xlu0 %696
    %v699 = vmul.f32 %v678, %v697
    %701 = vrot.lane.b32.xlu0 %v699, 32
    %v702 = vpop.permute.xlu0 %701
    %704 = vst.msk [vmem:[#allocation2 + $0x8] sm:$0x3] %vm262, %v702
    %v705 = vsel %vm159, %v702, 0
    %707 = vmatprep.subr.mxu0 0.0
    %708 = vmatpush1.msra.mxu0 0.0
    %709 = vmatprep.subr.mxu0 0.0
    %710 = vmatpush1.msra.mxu0 0.0
    %711 = vmatprep.subr.mxu0 0.0
    %712 = vmatpush1.msra.mxu0 0.0
    %713 = vmatprep.subr.mxu0 0.0
    %714 = vmatpush1.msra.mxu0 0.0
    %715 = vmatprep.subr.mxu0 0.0
    %716 = vmatpush1.msra.mxu0 0.0
    %717 = vmatprep.subr.mxu0 0.0
    %718 = vmatpush1.msra.mxu0 0.0
    %719 = vmatprep.subr.mxu0 0.0
    %720 = vmatpush1.msra.mxu0 0.0
    %721 = vmatprep.subr.mxu0 0.0
    %722 = vmatpush1.msra.mxu0 0.0
    %723 = vmatprep.subr.mxu0 0.0
    %724 = vmatpush1.msra.mxu0 0.0
    %725 = vmatprep.subr.mxu0 0.0
    %726 = vmatpush1.msra.mxu0 0.0
    %727 = vmatprep.subr.mxu0 0.0
    %728 = vmatpush1.msra.mxu0 0.0
    %729 = vmatprep.subr.mxu0 0.0
    %730 = vmatpush1.msra.mxu0 0.0
    %731 = vmatprep.subr.mxu0 0.0
    %732 = vmatpush1.msra.mxu0 %v69
    %733 = vmatprep.subr.mxu0 0.0
    %734 = vmatpush1.msra.mxu0 %v68
    %735 = vmatprep.subr.mxu0 0.0
    %736 = vmatpush1.msra.mxu0 %v67
    %737 = vmatprep.subr.mxu0 0.0
    %738 = vmatpush1.msra.mxu0 %v66
    %739 = vmatprep.subr.mxu0 0.0
    %740 = vmatpush2.msra.mxu0 0.0
    %741 = vmatprep.subr.mxu0 0.0
    %742 = vmatpush2.msra.mxu0 0.0
    %743 = vmatprep.subr.mxu0 0.0
    %744 = vmatpush2.msra.mxu0 0.0
    %745 = vmatprep.subr.mxu0 0.0
    %746 = vmatpush2.msra.mxu0 0.0
    %747 = vmatprep.subr.mxu0 0.0
    %748 = vmatpush2.msra.mxu0 0.0
    %749 = vmatprep.subr.mxu0 0.0
    %750 = vmatpush2.msra.mxu0 0.0
    %751 = vmatprep.subr.mxu0 0.0
    %752 = vmatpush2.msra.mxu0 0.0
    %753 = vmatprep.subr.mxu0 0.0
    %754 = vmatpush2.msra.mxu0 0.0
    %755 = vmatprep.subr.mxu0 0.0
    %756 = vmatpush2.msra.mxu0 0.0
    %757 = vmatprep.subr.mxu0 0.0
    %758 = vmatpush2.msra.mxu0 0.0
    %759 = vmatprep.subr.mxu0 0.0
    %760 = vmatpush2.msra.mxu0 0.0
    %761 = vmatprep.subr.mxu0 0.0
    %762 = vmatpush2.msra.mxu0 0.0
    %763 = vmatprep.subr.mxu0 0.0
    %764 = vmatpush2.msra.mxu0 0.0
    %765 = vmatprep.subr.mxu0 0.0
    %766 = vmatpush2.msra.mxu0 0.0
    %767 = vmatprep.subr.mxu0 0.0
    %768 = vmatpush2.msra.mxu0 0.0
    %769 = vmatprep.subr.mxu0 0.0
    %770 = vmatpush2.msra.mxu0 0.0
    %771 = vmatprep.mubr.f32.mxu0 0.0
    %772 = vmatmul.mubr.f32.gmra.mxu0 %v705
    %v773 = vpop.f32.mrf.mxu0
    %v774 = vadd.f32 0.0, %v773
    %v775 = vpop.f32.mrf.mxu0
    %776 = vdwg.mxu0
    %v778 = vrot.slane %v774, 6
    %v780 = vadd.f32 %v156, %v778
    %v781 = vxor.u32 %v780, 2147483648
    %v782 = vmul.f32 %v781, 1.442695
    %v783 = vpow.pop %v782
    %v784 = vadd.f32 %v783, 1.0
    %v785 = vrcp.pop %v784
    %v786 = vmul.f32 1.0, %v785
    %v787 = vtanh.pop %v780
    %v789 = vrot.slane %v693, 6
    %v791 = vmul.f32 %v786, %v789
    %793 = vrot.lane.b32.xlu0 %v787, 64
    %v794 = vpop.permute.xlu0 %793
    %v796 = vmul.f32 %v786, %v794
    %798 = vrot.lane.b32.xlu0 %v796, 32
    %v799 = vpop.permute.xlu0 %798
    %v801 = vadd.f32 %v791, %v799
    %v802 = vtanh.pop %v801
    %804 = vrot.lane.b32.xlu0 %v802, 64
    %v805 = vpop.permute.xlu0 %804
    %v807 = vmul.f32 %v786, %v805
    %809 = vrot.lane.b32.xlu0 %v807, 32
    %v810 = vpop.permute.xlu0 %809
    %812 = vst.msk [vmem:[#allocation2 + $0x8] sm:$0xc] %vm371, %v810
    %v813 = vrot.slane %v807, 2
    %814 = vrot.lane.b32.xlu0 %v813, 32
    %v815 = vpop.permute.xlu0 %814
    %v816 = vsel %vm159, %v815, 0
    %818 = vmatprep.subr.mxu0 0.0
    %819 = vmatpush1.msra.mxu0 0.0
    %820 = vmatprep.subr.mxu0 0.0
    %821 = vmatpush1.msra.mxu0 0.0
    %822 = vmatprep.subr.mxu0 0.0
    %823 = vmatpush1.msra.mxu0 0.0
    %824 = vmatprep.subr.mxu0 0.0
    %825 = vmatpush1.msra.mxu0 0.0
    %826 = vmatprep.subr.mxu0 0.0
    %827 = vmatpush1.msra.mxu0 0.0
    %828 = vmatprep.subr.mxu0 0.0
    %829 = vmatpush1.msra.mxu0 0.0
    %830 = vmatprep.subr.mxu0 0.0
    %831 = vmatpush1.msra.mxu0 0.0
    %832 = vmatprep.subr.mxu0 0.0
    %833 = vmatpush1.msra.mxu0 0.0
    %834 = vmatprep.subr.mxu0 0.0
    %835 = vmatpush1.msra.mxu0 0.0
    %836 = vmatprep.subr.mxu0 0.0
    %837 = vmatpush1.msra.mxu0 0.0
    %838 = vmatprep.subr.mxu0 0.0
    %839 = vmatpush1.msra.mxu0 0.0
    %840 = vmatprep.subr.mxu0 0.0
    %841 = vmatpush1.msra.mxu0 0.0
    %842 = vmatprep.subr.mxu0 0.0
    %843 = vmatpush1.msra.mxu0 %v69
    %844 = vmatprep.subr.mxu0 0.0
    %845 = vmatpush1.msra.mxu0 %v68
    %846 = vmatprep.subr.mxu0 0.0
    %847 = vmatpush1.msra.mxu0 %v67
    %848 = vmatprep.subr.mxu0 0.0
    %849 = vmatpush1.msra.mxu0 %v66
    %850 = vmatprep.subr.mxu0 0.0
    %851 = vmatpush2.msra.mxu0 0.0
    %852 = vmatprep.subr.mxu0 0.0
    %853 = vmatpush2.msra.mxu0 0.0
    %854 = vmatprep.subr.mxu0 0.0
    %855 = vmatpush2.msra.mxu0 0.0
    %856 = vmatprep.subr.mxu0 0.0
    %857 = vmatpush2.msra.mxu0 0.0
    %858 = vmatprep.subr.mxu0 0.0
    %859 = vmatpush2.msra.mxu0 0.0
    %860 = vmatprep.subr.mxu0 0.0
    %861 = vmatpush2.msra.mxu0 0.0
    %862 = vmatprep.subr.mxu0 0.0
    %863 = vmatpush2.msra.mxu0 0.0
    %864 = vmatprep.subr.mxu0 0.0
    %865 = vmatpush2.msra.mxu0 0.0
    %866 = vmatprep.subr.mxu0 0.0
    %867 = vmatpush2.msra.mxu0 0.0
    %868 = vmatprep.subr.mxu0 0.0
    %869 = vmatpush2.msra.mxu0 0.0
    %870 = vmatprep.subr.mxu0 0.0
    %871 = vmatpush2.msra.mxu0 0.0
    %872 = vmatprep.subr.mxu0 0.0
    %873 = vmatpush2.msra.mxu0 0.0
    %874 = vmatprep.subr.mxu0 0.0
    %875 = vmatpush2.msra.mxu0 0.0
    %876 = vmatprep.subr.mxu0 0.0
    %877 = vmatpush2.msra.mxu0 0.0
    %878 = vmatprep.subr.mxu0 0.0
    %879 = vmatpush2.msra.mxu0 0.0
    %880 = vmatprep.subr.mxu0 0.0
    %881 = vmatpush2.msra.mxu0 0.0
    %882 = vmatprep.mubr.f32.mxu0 0.0
    %883 = vmatmul.mubr.f32.gmra.mxu0 %v816
    %v884 = vpop.f32.mrf.mxu0
    %v885 = vadd.f32 0.0, %v884
    %v886 = vpop.f32.mrf.mxu0
    %887 = vdwg.mxu0
    %v889 = vrot.slane %v885, 4
    %v891 = vadd.f32 %v156, %v889
    %v892 = vxor.u32 %v891, 2147483648
    %v893 = vmul.f32 %v892, 1.442695
    %v894 = vpow.pop %v893
    %v895 = vadd.f32 %v894, 1.0
    %v896 = vrcp.pop %v895
    %v897 = vmul.f32 1.0, %v896
    %v898 = vtanh.pop %v891
    %v900 = vrot.slane %v801, 6
    %v902 = vmul.f32 %v897, %v900
    %904 = vrot.lane.b32.xlu0 %v898, 64
    %v905 = vpop.permute.xlu0 %904
    %v907 = vmul.f32 %v897, %v905
    %909 = vrot.lane.b32.xlu0 %v907, 32
    %v910 = vpop.permute.xlu0 %909
    %v912 = vadd.f32 %v902, %v910
    %v913 = vtanh.pop %v912
    %915 = vrot.lane.b32.xlu0 %v913, 64
    %v916 = vpop.permute.xlu0 %915
    %v918 = vmul.f32 %v897, %v916
    %920 = vrot.lane.b32.xlu0 %v918, 32
    %v921 = vpop.permute.xlu0 %920
    %923 = vst.msk [vmem:[#allocation2 + $0x8] sm:$0x30] %vm483, %v921
    %v924 = vrot.slane %v918, 4
    %925 = vrot.lane.b32.xlu0 %v924, 32
    %v926 = vpop.permute.xlu0 %925
    %v927 = vsel %vm159, %v926, 0
    %929 = vmatprep.subr.mxu0 0.0
    %930 = vmatpush1.msra.mxu0 0.0
    %931 = vmatprep.subr.mxu0 0.0
    %932 = vmatpush1.msra.mxu0 0.0
    %933 = vmatprep.subr.mxu0 0.0
    %934 = vmatpush1.msra.mxu0 0.0
    %935 = vmatprep.subr.mxu0 0.0
    %936 = vmatpush1.msra.mxu0 0.0
    %937 = vmatprep.subr.mxu0 0.0
    %938 = vmatpush1.msra.mxu0 0.0
    %939 = vmatprep.subr.mxu0 0.0
    %940 = vmatpush1.msra.mxu0 0.0
    %941 = vmatprep.subr.mxu0 0.0
    %942 = vmatpush1.msra.mxu0 0.0
    %943 = vmatprep.subr.mxu0 0.0
    %944 = vmatpush1.msra.mxu0 0.0
    %945 = vmatprep.subr.mxu0 0.0
    %946 = vmatpush1.msra.mxu0 0.0
    %947 = vmatprep.subr.mxu0 0.0
    %948 = vmatpush1.msra.mxu0 0.0
    %949 = vmatprep.subr.mxu0 0.0
    %950 = vmatpush1.msra.mxu0 0.0
    %951 = vmatprep.subr.mxu0 0.0
    %952 = vmatpush1.msra.mxu0 0.0
    %953 = vmatprep.subr.mxu0 0.0
    %954 = vmatpush1.msra.mxu0 %v69
    %955 = vmatprep.subr.mxu0 0.0
    %956 = vmatpush1.msra.mxu0 %v68
    %957 = vmatprep.subr.mxu0 0.0
    %958 = vmatpush1.msra.mxu0 %v67
    %959 = vmatprep.subr.mxu0 0.0
    %960 = vmatpush1.msra.mxu0 %v66
    %961 = vmatprep.subr.mxu0 0.0
    %962 = vmatpush2.msra.mxu0 0.0
    %963 = vmatprep.subr.mxu0 0.0
    %964 = vmatpush2.msra.mxu0 0.0
    %965 = vmatprep.subr.mxu0 0.0
    %966 = vmatpush2.msra.mxu0 0.0
    %967 = vmatprep.subr.mxu0 0.0
    %968 = vmatpush2.msra.mxu0 0.0
    %969 = vmatprep.subr.mxu0 0.0
    %970 = vmatpush2.msra.mxu0 0.0
    %971 = vmatprep.subr.mxu0 0.0
    %972 = vmatpush2.msra.mxu0 0.0
    %973 = vmatprep.subr.mxu0 0.0
    %974 = vmatpush2.msra.mxu0 0.0
    %975 = vmatprep.subr.mxu0 0.0
    %976 = vmatpush2.msra.mxu0 0.0
    %977 = vmatprep.subr.mxu0 0.0
    %978 = vmatpush2.msra.mxu0 0.0
    %979 = vmatprep.subr.mxu0 0.0
    %980 = vmatpush2.msra.mxu0 0.0
    %981 = vmatprep.subr.mxu0 0.0
    %982 = vmatpush2.msra.mxu0 0.0
    %983 = vmatprep.subr.mxu0 0.0
    %984 = vmatpush2.msra.mxu0 0.0
    %985 = vmatprep.subr.mxu0 0.0
    %986 = vmatpush2.msra.mxu0 0.0
    %987 = vmatprep.subr.mxu0 0.0
    %988 = vmatpush2.msra.mxu0 0.0
    %989 = vmatprep.subr.mxu0 0.0
    %990 = vmatpush2.msra.mxu0 0.0
    %991 = vmatprep.subr.mxu0 0.0
    %992 = vmatpush2.msra.mxu0 0.0
    %993 = vmatprep.mubr.f32.mxu0 0.0
    %994 = vmatmul.mubr.f32.gmra.mxu0 %v927
    %v995 = vpop.f32.mrf.mxu0
    %v996 = vadd.f32 0.0, %v995
    %v997 = vpop.f32.mrf.mxu0
    %998 = vdwg.mxu0
    %v1000 = vrot.slane %v996, 2
    %v1002 = vadd.f32 %v156, %v1000
    %v1003 = vxor.u32 %v1002, 2147483648
    %v1004 = vmul.f32 %v1003, 1.442695
    %v1005 = vpow.pop %v1004
    %v1006 = vadd.f32 %v1005, 1.0
    %v1007 = vrcp.pop %v1006
    %v1008 = vmul.f32 1.0, %v1007
    %v1009 = vtanh.pop %v1002
    %v1011 = vrot.slane %v912, 6
    %v1013 = vmul.f32 %v1008, %v1011
    %1015 = vrot.lane.b32.xlu0 %v1009, 64
    %v1016 = vpop.permute.xlu0 %1015
    %v1018 = vmul.f32 %v1008, %v1016
    %1020 = vrot.lane.b32.xlu0 %v1018, 32
    %v1021 = vpop.permute.xlu0 %1020
    %v1023 = vadd.f32 %v1013, %v1021
    %v1024 = vtanh.pop %v1023
    %1026 = vrot.lane.b32.xlu0 %v1024, 64
    %v1027 = vpop.permute.xlu0 %1026
    %v1029 = vmul.f32 %v1008, %v1027
    %1031 = vrot.lane.b32.xlu0 %v1029, 32
    %v1032 = vpop.permute.xlu0 %1031
    %1034 = vst.msk [vmem:[#allocation2 + $0x8] sm:$0xc0] %vm595, %v1032
    %v1035 = vld [vmem:[#allocation2] sm:$0xff]
    %v1036 = vld [vmem:[#allocation2 + $0x8] sm:$0xff]
    %v1037 = vld [vmem:[%s4] sm:$0xff]
    %v1038 = vld [vmem:[%s4 + $0x8] sm:$0xff]
    %v1039 = vld [vmem:[%s4 + $0x10] sm:$0xff]
    %v1040 = vld [vmem:[%s4 + $0x18] sm:$0xff]
    %v1041 = vld [vmem:[#allocation6] sm:$0xff]
    %v1042 = vld [vmem:[#allocation6 + $0x8] sm:$0xff]
    %v1043 = vld [vmem:[#allocation6 + $0x10] sm:$0xff]
    %v1044 = vld [vmem:[#allocation6 + $0x18] sm:$0xff]
    %v1045 = vld [vmem:[%s6] sm:$0x1]
    %v1047 = vlaneseq
    %v1048 = vshrl.u32 %v1047, 7
    %v1049 = vsub.s32 0, %v1048
    %v1050 = vrot.slane %v1045, %v1049
    %v1053 = vsel %vm159, %v1035, 0
    %v1056 = vsel %vm159, %v1036, 0
    %1058 = vmatprep.subr.mxu0 0.0
    %1059 = vmatpush1.msra.mxu0 0.0
    %1060 = vmatprep.subr.mxu0 0.0
    %1061 = vmatpush1.msra.mxu0 0.0
    %1062 = vmatprep.subr.mxu0 0.0
    %1063 = vmatpush1.msra.mxu0 0.0
    %1064 = vmatprep.subr.mxu0 0.0
    %1065 = vmatpush1.msra.mxu0 0.0
    %1066 = vmatprep.subr.mxu0 0.0
    %1067 = vmatpush1.msra.mxu0 0.0
    %1068 = vmatprep.subr.mxu0 0.0
    %1069 = vmatpush1.msra.mxu0 0.0
    %1070 = vmatprep.subr.mxu0 0.0
    %1071 = vmatpush1.msra.mxu0 0.0
    %1072 = vmatprep.subr.mxu0 0.0
    %1073 = vmatpush1.msra.mxu0 0.0
    %1074 = vmatprep.subr.mxu0 0.0
    %1075 = vmatpush1.msra.mxu0 0.0
    %1076 = vmatprep.subr.mxu0 0.0
    %1077 = vmatpush1.msra.mxu0 0.0
    %1078 = vmatprep.subr.mxu0 0.0
    %1079 = vmatpush1.msra.mxu0 0.0
    %1080 = vmatprep.subr.mxu0 0.0
    %1081 = vmatpush1.msra.mxu0 0.0
    %1082 = vmatprep.subr.mxu0 0.0
    %1083 = vmatpush1.msra.mxu0 %v1040
    %1084 = vmatprep.subr.mxu0 0.0
    %1085 = vmatpush1.msra.mxu0 %v1039
    %1086 = vmatprep.subr.mxu0 0.0
    %1087 = vmatpush1.msra.mxu0 %v1038
    %1088 = vmatprep.subr.mxu0 0.0
    %1089 = vmatpush1.msra.mxu0 %v1037
    %1090 = vmatprep.subr.mxu0 0.0
    %1091 = vmatpush2.msra.mxu0 0.0
    %1092 = vmatprep.subr.mxu0 0.0
    %1093 = vmatpush2.msra.mxu0 0.0
    %1094 = vmatprep.subr.mxu0 0.0
    %1095 = vmatpush2.msra.mxu0 0.0
    %1096 = vmatprep.subr.mxu0 0.0
    %1097 = vmatpush2.msra.mxu0 0.0
    %1098 = vmatprep.subr.mxu0 0.0
    %1099 = vmatpush2.msra.mxu0 0.0
    %1100 = vmatprep.subr.mxu0 0.0
    %1101 = vmatpush2.msra.mxu0 0.0
    %1102 = vmatprep.subr.mxu0 0.0
    %1103 = vmatpush2.msra.mxu0 0.0
    %1104 = vmatprep.subr.mxu0 0.0
    %1105 = vmatpush2.msra.mxu0 0.0
    %1106 = vmatprep.subr.mxu0 0.0
    %1107 = vmatpush2.msra.mxu0 0.0
    %1108 = vmatprep.subr.mxu0 0.0
    %1109 = vmatpush2.msra.mxu0 0.0
    %1110 = vmatprep.subr.mxu0 0.0
    %1111 = vmatpush2.msra.mxu0 0.0
    %1112 = vmatprep.subr.mxu0 0.0
    %1113 = vmatpush2.msra.mxu0 0.0
    %1114 = vmatprep.subr.mxu0 0.0
    %1115 = vmatpush2.msra.mxu0 0.0
    %1116 = vmatprep.subr.mxu0 0.0
    %1117 = vmatpush2.msra.mxu0 0.0
    %1118 = vmatprep.subr.mxu0 0.0
    %1119 = vmatpush2.msra.mxu0 0.0
    %1120 = vmatprep.subr.mxu0 0.0
    %1121 = vmatpush2.msra.mxu0 0.0
    %1122 = vmatprep.mubr.f32.mxu0 0.0
    %1123 = vmatmul.mubr.f32.gmra.mxu0 %v1053
    %v1124 = vpop.f32.mrf.mxu0
    %v1125 = vadd.f32 %v1050, %v1124
    %v1126 = vpop.f32.mrf.mxu0
    %1127 = vmatprep.mubr.f32.mxu0 0.0
    %1128 = vmatmul.mubr.f32.gmra.mxu0 %v1056
    %v1129 = vpop.f32.mrf.mxu0
    %v1130 = vadd.f32 %v1050, %v1129
    %v1131 = vpop.f32.mrf.mxu0
    %1132 = vdwg.mxu0
    %1133 = vmatprep.subr.mxu0 0.0
    %1134 = vmatpush1.msra.mxu0 0.0
    %1135 = vmatprep.subr.mxu0 0.0
    %1136 = vmatpush1.msra.mxu0 0.0
    %1137 = vmatprep.subr.mxu0 0.0
    %1138 = vmatpush1.msra.mxu0 0.0
    %1139 = vmatprep.subr.mxu0 0.0
    %1140 = vmatpush1.msra.mxu0 0.0
    %1141 = vmatprep.subr.mxu0 0.0
    %1142 = vmatpush1.msra.mxu0 0.0
    %1143 = vmatprep.subr.mxu0 0.0
    %1144 = vmatpush1.msra.mxu0 0.0
    %1145 = vmatprep.subr.mxu0 0.0
    %1146 = vmatpush1.msra.mxu0 0.0
    %1147 = vmatprep.subr.mxu0 0.0
    %1148 = vmatpush1.msra.mxu0 0.0
    %1149 = vmatprep.subr.mxu0 0.0
    %1150 = vmatpush1.msra.mxu0 0.0
    %1151 = vmatprep.subr.mxu0 0.0
    %1152 = vmatpush1.msra.mxu0 0.0
    %1153 = vmatprep.subr.mxu0 0.0
    %1154 = vmatpush1.msra.mxu0 0.0
    %1155 = vmatprep.subr.mxu0 0.0
    %1156 = vmatpush1.msra.mxu0 0.0
    %1157 = vmatprep.subr.mxu0 0.0
    %1158 = vmatpush1.msra.mxu0 %v1044
    %1159 = vmatprep.subr.mxu0 0.0
    %1160 = vmatpush1.msra.mxu0 %v1043
    %1161 = vmatprep.subr.mxu0 0.0
    %1162 = vmatpush1.msra.mxu0 %v1042
    %1163 = vmatprep.subr.mxu0 0.0
    %1164 = vmatpush1.msra.mxu0 %v1041
    %1165 = vmatprep.subr.mxu0 0.0
    %1166 = vmatpush2.msra.mxu0 0.0
    %1167 = vmatprep.subr.mxu0 0.0
    %1168 = vmatpush2.msra.mxu0 0.0
    %1169 = vmatprep.subr.mxu0 0.0
    %1170 = vmatpush2.msra.mxu0 0.0
    %1171 = vmatprep.subr.mxu0 0.0
    %1172 = vmatpush2.msra.mxu0 0.0
    %1173 = vmatprep.subr.mxu0 0.0
    %1174 = vmatpush2.msra.mxu0 0.0
    %1175 = vmatprep.subr.mxu0 0.0
    %1176 = vmatpush2.msra.mxu0 0.0
    %1177 = vmatprep.subr.mxu0 0.0
    %1178 = vmatpush2.msra.mxu0 0.0
    %1179 = vmatprep.subr.mxu0 0.0
    %1180 = vmatpush2.msra.mxu0 0.0
    %1181 = vmatprep.subr.mxu0 0.0
    %1182 = vmatpush2.msra.mxu0 0.0
    %1183 = vmatprep.subr.mxu0 0.0
    %1184 = vmatpush2.msra.mxu0 0.0
    %1185 = vmatprep.subr.mxu0 0.0
    %1186 = vmatpush2.msra.mxu0 0.0
    %1187 = vmatprep.subr.mxu0 0.0
    %1188 = vmatpush2.msra.mxu0 0.0
    %1189 = vmatprep.subr.mxu0 0.0
    %1190 = vmatpush2.msra.mxu0 0.0
    %1191 = vmatprep.subr.mxu0 0.0
    %1192 = vmatpush2.msra.mxu0 0.0
    %1193 = vmatprep.subr.mxu0 0.0
    %1194 = vmatpush2.msra.mxu0 0.0
    %1195 = vmatprep.subr.mxu0 0.0
    %1196 = vmatpush2.msra.mxu0 0.0
    %1197 = vmatprep.mubr.f32.mxu0 0.0
    %1198 = vmatmul.mubr.f32.gmra.mxu0 %v161
    %v1199 = vpop.f32.mrf.mxu0
    %v1200 = vadd.f32 0.0, %v1199
    %v1201 = vpop.f32.mrf.mxu0
    %1202 = vdwg.mxu0
    %v1203 = vadd.f32 %v1125, %v1200
    %v1204 = vxor.u32 %v1203, 2147483648
    %v1205 = vmul.f32 %v1204, 1.442695
    %v1206 = vpow.pop %v1205
    %v1207 = vadd.f32 %v1206, 1.0
    %v1208 = vrcp.pop %v1207
    %v1209 = vmul.f32 1.0, %v1208
    %v1210 = vtanh.pop %v1203
    %v1211 = vmul.f32 %v1209, 0.0
    %1213 = vrot.lane.b32.xlu0 %v1210, 64
    %v1214 = vpop.permute.xlu0 %1213
    %v1216 = vmul.f32 %v1209, %v1214
    %1218 = vrot.lane.b32.xlu0 %v1216, 32
    %v1219 = vpop.permute.xlu0 %1218
    %v1221 = vadd.f32 %v1211, %v1219
    %v1222 = vtanh.pop %v1221
    %1224 = vrot.lane.b32.xlu0 %v1222, 64
    %v1225 = vpop.permute.xlu0 %1224
    %v1227 = vmul.f32 %v1209, %v1225
    %1229 = vrot.lane.b32.xlu0 %v1227, 32
    %v1230 = vpop.permute.xlu0 %1229
    %v1231 = vsel %vm159, %v1230, 0
    %1233 = vmatprep.subr.mxu0 0.0
    %1234 = vmatpush1.msra.mxu0 0.0
    %1235 = vmatprep.subr.mxu0 0.0
    %1236 = vmatpush1.msra.mxu0 0.0
    %1237 = vmatprep.subr.mxu0 0.0
    %1238 = vmatpush1.msra.mxu0 0.0
    %1239 = vmatprep.subr.mxu0 0.0
    %1240 = vmatpush1.msra.mxu0 0.0
    %1241 = vmatprep.subr.mxu0 0.0
    %1242 = vmatpush1.msra.mxu0 0.0
    %1243 = vmatprep.subr.mxu0 0.0
    %1244 = vmatpush1.msra.mxu0 0.0
    %1245 = vmatprep.subr.mxu0 0.0
    %1246 = vmatpush1.msra.mxu0 0.0
    %1247 = vmatprep.subr.mxu0 0.0
    %1248 = vmatpush1.msra.mxu0 0.0
    %1249 = vmatprep.subr.mxu0 0.0
    %1250 = vmatpush1.msra.mxu0 0.0
    %1251 = vmatprep.subr.mxu0 0.0
    %1252 = vmatpush1.msra.mxu0 0.0
    %1253 = vmatprep.subr.mxu0 0.0
    %1254 = vmatpush1.msra.mxu0 0.0
    %1255 = vmatprep.subr.mxu0 0.0
    %1256 = vmatpush1.msra.mxu0 0.0
    %1257 = vmatprep.subr.mxu0 0.0
    %1258 = vmatpush1.msra.mxu0 %v1044
    %1259 = vmatprep.subr.mxu0 0.0
    %1260 = vmatpush1.msra.mxu0 %v1043
    %1261 = vmatprep.subr.mxu0 0.0
    %1262 = vmatpush1.msra.mxu0 %v1042
    %1263 = vmatprep.subr.mxu0 0.0
    %1264 = vmatpush1.msra.mxu0 %v1041
    %1265 = vmatprep.subr.mxu0 0.0
    %1266 = vmatpush2.msra.mxu0 0.0
    %1267 = vmatprep.subr.mxu0 0.0
    %1268 = vmatpush2.msra.mxu0 0.0
    %1269 = vmatprep.subr.mxu0 0.0
    %1270 = vmatpush2.msra.mxu0 0.0
    %1271 = vmatprep.subr.mxu0 0.0
    %1272 = vmatpush2.msra.mxu0 0.0
    %1273 = vmatprep.subr.mxu0 0.0
    %1274 = vmatpush2.msra.mxu0 0.0
    %1275 = vmatprep.subr.mxu0 0.0
    %1276 = vmatpush2.msra.mxu0 0.0
    %1277 = vmatprep.subr.mxu0 0.0
    %1278 = vmatpush2.msra.mxu0 0.0
    %1279 = vmatprep.subr.mxu0 0.0
    %1280 = vmatpush2.msra.mxu0 0.0
    %1281 = vmatprep.subr.mxu0 0.0
    %1282 = vmatpush2.msra.mxu0 0.0
    %1283 = vmatprep.subr.mxu0 0.0
    %1284 = vmatpush2.msra.mxu0 0.0
    %1285 = vmatprep.subr.mxu0 0.0
    %1286 = vmatpush2.msra.mxu0 0.0
    %1287 = vmatprep.subr.mxu0 0.0
    %1288 = vmatpush2.msra.mxu0 0.0
    %1289 = vmatprep.subr.mxu0 0.0
    %1290 = vmatpush2.msra.mxu0 0.0
    %1291 = vmatprep.subr.mxu0 0.0
    %1292 = vmatpush2.msra.mxu0 0.0
    %1293 = vmatprep.subr.mxu0 0.0
    %1294 = vmatpush2.msra.mxu0 0.0
    %1295 = vmatprep.subr.mxu0 0.0
    %1296 = vmatpush2.msra.mxu0 0.0
    %1297 = vmatprep.mubr.f32.mxu0 0.0
    %1298 = vmatmul.mubr.f32.gmra.mxu0 %v1231
    %v1299 = vpop.f32.mrf.mxu0
    %v1300 = vadd.f32 0.0, %v1299
    %v1301 = vpop.f32.mrf.mxu0
    %1302 = vdwg.mxu0
    %v1304 = vrot.slane %v1300, 6
    %v1306 = vadd.f32 %v1125, %v1304
    %v1307 = vxor.u32 %v1306, 2147483648
    %v1308 = vmul.f32 %v1307, 1.442695
    %v1309 = vpow.pop %v1308
    %v1310 = vadd.f32 %v1309, 1.0
    %v1311 = vrcp.pop %v1310
    %v1312 = vmul.f32 1.0, %v1311
    %v1313 = vtanh.pop %v1306
    %v1315 = vrot.slane %v1221, 6
    %v1317 = vmul.f32 %v1312, %v1315
    %1319 = vrot.lane.b32.xlu0 %v1313, 64
    %v1320 = vpop.permute.xlu0 %1319
    %v1322 = vmul.f32 %v1312, %v1320
    %1324 = vrot.lane.b32.xlu0 %v1322, 32
    %v1325 = vpop.permute.xlu0 %1324
    %v1327 = vadd.f32 %v1317, %v1325
    %v1328 = vtanh.pop %v1327
    %1330 = vrot.lane.b32.xlu0 %v1328, 64
    %v1331 = vpop.permute.xlu0 %1330
    %v1333 = vmul.f32 %v1312, %v1331
    %v1335 = vrot.slane %v1333, 2
    %1336 = vrot.lane.b32.xlu0 %v1335, 32
    %v1337 = vpop.permute.xlu0 %1336
    %v1338 = vsel %vm159, %v1337, 0
    %1340 = vmatprep.subr.mxu0 0.0
    %1341 = vmatpush1.msra.mxu0 0.0
    %1342 = vmatprep.subr.mxu0 0.0
    %1343 = vmatpush1.msra.mxu0 0.0
    %1344 = vmatprep.subr.mxu0 0.0
    %1345 = vmatpush1.msra.mxu0 0.0
    %1346 = vmatprep.subr.mxu0 0.0
    %1347 = vmatpush1.msra.mxu0 0.0
    %1348 = vmatprep.subr.mxu0 0.0
    %1349 = vmatpush1.msra.mxu0 0.0
    %1350 = vmatprep.subr.mxu0 0.0
    %1351 = vmatpush1.msra.mxu0 0.0
    %1352 = vmatprep.subr.mxu0 0.0
    %1353 = vmatpush1.msra.mxu0 0.0
    %1354 = vmatprep.subr.mxu0 0.0
    %1355 = vmatpush1.msra.mxu0 0.0
    %1356 = vmatprep.subr.mxu0 0.0
    %1357 = vmatpush1.msra.mxu0 0.0
    %1358 = vmatprep.subr.mxu0 0.0
    %1359 = vmatpush1.msra.mxu0 0.0
    %1360 = vmatprep.subr.mxu0 0.0
    %1361 = vmatpush1.msra.mxu0 0.0
    %1362 = vmatprep.subr.mxu0 0.0
    %1363 = vmatpush1.msra.mxu0 0.0
    %1364 = vmatprep.subr.mxu0 0.0
    %1365 = vmatpush1.msra.mxu0 %v1044
    %1366 = vmatprep.subr.mxu0 0.0
    %1367 = vmatpush1.msra.mxu0 %v1043
    %1368 = vmatprep.subr.mxu0 0.0
    %1369 = vmatpush1.msra.mxu0 %v1042
    %1370 = vmatprep.subr.mxu0 0.0
    %1371 = vmatpush1.msra.mxu0 %v1041
    %1372 = vmatprep.subr.mxu0 0.0
    %1373 = vmatpush2.msra.mxu0 0.0
    %1374 = vmatprep.subr.mxu0 0.0
    %1375 = vmatpush2.msra.mxu0 0.0
    %1376 = vmatprep.subr.mxu0 0.0
    %1377 = vmatpush2.msra.mxu0 0.0
    %1378 = vmatprep.subr.mxu0 0.0
    %1379 = vmatpush2.msra.mxu0 0.0
    %1380 = vmatprep.subr.mxu0 0.0
    %1381 = vmatpush2.msra.mxu0 0.0
    %1382 = vmatprep.subr.mxu0 0.0
    %1383 = vmatpush2.msra.mxu0 0.0
    %1384 = vmatprep.subr.mxu0 0.0
    %1385 = vmatpush2.msra.mxu0 0.0
    %1386 = vmatprep.subr.mxu0 0.0
    %1387 = vmatpush2.msra.mxu0 0.0
    %1388 = vmatprep.subr.mxu0 0.0
    %1389 = vmatpush2.msra.mxu0 0.0
    %1390 = vmatprep.subr.mxu0 0.0
    %1391 = vmatpush2.msra.mxu0 0.0
    %1392 = vmatprep.subr.mxu0 0.0
    %1393 = vmatpush2.msra.mxu0 0.0
    %1394 = vmatprep.subr.mxu0 0.0
    %1395 = vmatpush2.msra.mxu0 0.0
    %1396 = vmatprep.subr.mxu0 0.0
    %1397 = vmatpush2.msra.mxu0 0.0
    %1398 = vmatprep.subr.mxu0 0.0
    %1399 = vmatpush2.msra.mxu0 0.0
    %1400 = vmatprep.subr.mxu0 0.0
    %1401 = vmatpush2.msra.mxu0 0.0
    %1402 = vmatprep.subr.mxu0 0.0
    %1403 = vmatpush2.msra.mxu0 0.0
    %1404 = vmatprep.mubr.f32.mxu0 0.0
    %1405 = vmatmul.mubr.f32.gmra.mxu0 %v1338
    %v1406 = vpop.f32.mrf.mxu0
    %v1407 = vadd.f32 0.0, %v1406
    %v1408 = vpop.f32.mrf.mxu0
    %1409 = vdwg.mxu0
    %v1411 = vrot.slane %v1407, 4
    %v1413 = vadd.f32 %v1125, %v1411
    %v1414 = vxor.u32 %v1413, 2147483648
    %v1415 = vmul.f32 %v1414, 1.442695
    %v1416 = vpow.pop %v1415
    %v1417 = vadd.f32 %v1416, 1.0
    %v1418 = vrcp.pop %v1417
    %v1419 = vmul.f32 1.0, %v1418
    %v1420 = vtanh.pop %v1413
    %v1422 = vrot.slane %v1327, 6
    %v1424 = vmul.f32 %v1419, %v1422
    %1426 = vrot.lane.b32.xlu0 %v1420, 64
    %v1427 = vpop.permute.xlu0 %1426
    %v1429 = vmul.f32 %v1419, %v1427
    %1431 = vrot.lane.b32.xlu0 %v1429, 32
    %v1432 = vpop.permute.xlu0 %1431
    %v1434 = vadd.f32 %v1424, %v1432
    %v1435 = vtanh.pop %v1434
    %1437 = vrot.lane.b32.xlu0 %v1435, 64
    %v1438 = vpop.permute.xlu0 %1437
    %v1440 = vmul.f32 %v1419, %v1438
    %v1442 = vrot.slane %v1440, 4
    %1443 = vrot.lane.b32.xlu0 %v1442, 32
    %v1444 = vpop.permute.xlu0 %1443
    %v1445 = vsel %vm159, %v1444, 0
    %1447 = vmatprep.subr.mxu0 0.0
    %1448 = vmatpush1.msra.mxu0 0.0
    %1449 = vmatprep.subr.mxu0 0.0
    %1450 = vmatpush1.msra.mxu0 0.0
    %1451 = vmatprep.subr.mxu0 0.0
    %1452 = vmatpush1.msra.mxu0 0.0
    %1453 = vmatprep.subr.mxu0 0.0
    %1454 = vmatpush1.msra.mxu0 0.0
    %1455 = vmatprep.subr.mxu0 0.0
    %1456 = vmatpush1.msra.mxu0 0.0
    %1457 = vmatprep.subr.mxu0 0.0
    %1458 = vmatpush1.msra.mxu0 0.0
    %1459 = vmatprep.subr.mxu0 0.0
    %1460 = vmatpush1.msra.mxu0 0.0
    %1461 = vmatprep.subr.mxu0 0.0
    %1462 = vmatpush1.msra.mxu0 0.0
    %1463 = vmatprep.subr.mxu0 0.0
    %1464 = vmatpush1.msra.mxu0 0.0
    %1465 = vmatprep.subr.mxu0 0.0
    %1466 = vmatpush1.msra.mxu0 0.0
    %1467 = vmatprep.subr.mxu0 0.0
    %1468 = vmatpush1.msra.mxu0 0.0
    %1469 = vmatprep.subr.mxu0 0.0
    %1470 = vmatpush1.msra.mxu0 0.0
    %1471 = vmatprep.subr.mxu0 0.0
    %1472 = vmatpush1.msra.mxu0 %v1044
    %1473 = vmatprep.subr.mxu0 0.0
    %1474 = vmatpush1.msra.mxu0 %v1043
    %1475 = vmatprep.subr.mxu0 0.0
    %1476 = vmatpush1.msra.mxu0 %v1042
    %1477 = vmatprep.subr.mxu0 0.0
    %1478 = vmatpush1.msra.mxu0 %v1041
    %1479 = vmatprep.subr.mxu0 0.0
    %1480 = vmatpush2.msra.mxu0 0.0
    %1481 = vmatprep.subr.mxu0 0.0
    %1482 = vmatpush2.msra.mxu0 0.0
    %1483 = vmatprep.subr.mxu0 0.0
    %1484 = vmatpush2.msra.mxu0 0.0
    %1485 = vmatprep.subr.mxu0 0.0
    %1486 = vmatpush2.msra.mxu0 0.0
    %1487 = vmatprep.subr.mxu0 0.0
    %1488 = vmatpush2.msra.mxu0 0.0
    %1489 = vmatprep.subr.mxu0 0.0
    %1490 = vmatpush2.msra.mxu0 0.0
    %1491 = vmatprep.subr.mxu0 0.0
    %1492 = vmatpush2.msra.mxu0 0.0
    %1493 = vmatprep.subr.mxu0 0.0
    %1494 = vmatpush2.msra.mxu0 0.0
    %1495 = vmatprep.subr.mxu0 0.0
    %1496 = vmatpush2.msra.mxu0 0.0
    %1497 = vmatprep.subr.mxu0 0.0
    %1498 = vmatpush2.msra.mxu0 0.0
    %1499 = vmatprep.subr.mxu0 0.0
    %1500 = vmatpush2.msra.mxu0 0.0
    %1501 = vmatprep.subr.mxu0 0.0
    %1502 = vmatpush2.msra.mxu0 0.0
    %1503 = vmatprep.subr.mxu0 0.0
    %1504 = vmatpush2.msra.mxu0 0.0
    %1505 = vmatprep.subr.mxu0 0.0
    %1506 = vmatpush2.msra.mxu0 0.0
    %1507 = vmatprep.subr.mxu0 0.0
    %1508 = vmatpush2.msra.mxu0 0.0
    %1509 = vmatprep.subr.mxu0 0.0
    %1510 = vmatpush2.msra.mxu0 0.0
    %1511 = vmatprep.mubr.f32.mxu0 0.0
    %1512 = vmatmul.mubr.f32.gmra.mxu0 %v1445
    %v1513 = vpop.f32.mrf.mxu0
    %v1514 = vadd.f32 0.0, %v1513
    %v1515 = vpop.f32.mrf.mxu0
    %1516 = vdwg.mxu0
    %v1518 = vrot.slane %v1514, 2
    %v1520 = vadd.f32 %v1125, %v1518
    %v1521 = vxor.u32 %v1520, 2147483648
    %v1522 = vmul.f32 %v1521, 1.442695
    %v1523 = vpow.pop %v1522
    %v1524 = vadd.f32 %v1523, 1.0
    %v1525 = vrcp.pop %v1524
    %v1526 = vmul.f32 1.0, %v1525
    %v1527 = vtanh.pop %v1520
    %v1529 = vrot.slane %v1434, 6
    %v1531 = vmul.f32 %v1526, %v1529
    %1533 = vrot.lane.b32.xlu0 %v1527, 64
    %v1534 = vpop.permute.xlu0 %1533
    %v1536 = vmul.f32 %v1526, %v1534
    %1538 = vrot.lane.b32.xlu0 %v1536, 32
    %v1539 = vpop.permute.xlu0 %1538
    %v1541 = vadd.f32 %v1531, %v1539
    %v1542 = vtanh.pop %v1541
    %1544 = vrot.lane.b32.xlu0 %v1542, 64
    %v1545 = vpop.permute.xlu0 %1544
    %v1547 = vmul.f32 %v1526, %v1545
    %v1549 = vrot.slane %v1547, 6
    %1550 = vrot.lane.b32.xlu0 %v1549, 32
    %v1551 = vpop.permute.xlu0 %1550
    %v1552 = vsel %vm159, %v1551, 0
    %1554 = vmatprep.subr.mxu0 0.0
    %1555 = vmatpush1.msra.mxu0 0.0
    %1556 = vmatprep.subr.mxu0 0.0
    %1557 = vmatpush1.msra.mxu0 0.0
    %1558 = vmatprep.subr.mxu0 0.0
    %1559 = vmatpush1.msra.mxu0 0.0
    %1560 = vmatprep.subr.mxu0 0.0
    %1561 = vmatpush1.msra.mxu0 0.0
    %1562 = vmatprep.subr.mxu0 0.0
    %1563 = vmatpush1.msra.mxu0 0.0
    %1564 = vmatprep.subr.mxu0 0.0
    %1565 = vmatpush1.msra.mxu0 0.0
    %1566 = vmatprep.subr.mxu0 0.0
    %1567 = vmatpush1.msra.mxu0 0.0
    %1568 = vmatprep.subr.mxu0 0.0
    %1569 = vmatpush1.msra.mxu0 0.0
    %1570 = vmatprep.subr.mxu0 0.0
    %1571 = vmatpush1.msra.mxu0 0.0
    %1572 = vmatprep.subr.mxu0 0.0
    %1573 = vmatpush1.msra.mxu0 0.0
    %1574 = vmatprep.subr.mxu0 0.0
    %1575 = vmatpush1.msra.mxu0 0.0
    %1576 = vmatprep.subr.mxu0 0.0
    %1577 = vmatpush1.msra.mxu0 0.0
    %1578 = vmatprep.subr.mxu0 0.0
    %1579 = vmatpush1.msra.mxu0 %v1044
    %1580 = vmatprep.subr.mxu0 0.0
    %1581 = vmatpush1.msra.mxu0 %v1043
    %1582 = vmatprep.subr.mxu0 0.0
    %1583 = vmatpush1.msra.mxu0 %v1042
    %1584 = vmatprep.subr.mxu0 0.0
    %1585 = vmatpush1.msra.mxu0 %v1041
    %1586 = vmatprep.subr.mxu0 0.0
    %1587 = vmatpush2.msra.mxu0 0.0
    %1588 = vmatprep.subr.mxu0 0.0
    %1589 = vmatpush2.msra.mxu0 0.0
    %1590 = vmatprep.subr.mxu0 0.0
    %1591 = vmatpush2.msra.mxu0 0.0
    %1592 = vmatprep.subr.mxu0 0.0
    %1593 = vmatpush2.msra.mxu0 0.0
    %1594 = vmatprep.subr.mxu0 0.0
    %1595 = vmatpush2.msra.mxu0 0.0
    %1596 = vmatprep.subr.mxu0 0.0
    %1597 = vmatpush2.msra.mxu0 0.0
    %1598 = vmatprep.subr.mxu0 0.0
    %1599 = vmatpush2.msra.mxu0 0.0
    %1600 = vmatprep.subr.mxu0 0.0
    %1601 = vmatpush2.msra.mxu0 0.0
    %1602 = vmatprep.subr.mxu0 0.0
    %1603 = vmatpush2.msra.mxu0 0.0
    %1604 = vmatprep.subr.mxu0 0.0
    %1605 = vmatpush2.msra.mxu0 0.0
    %1606 = vmatprep.subr.mxu0 0.0
    %1607 = vmatpush2.msra.mxu0 0.0
    %1608 = vmatprep.subr.mxu0 0.0
    %1609 = vmatpush2.msra.mxu0 0.0
    %1610 = vmatprep.subr.mxu0 0.0
    %1611 = vmatpush2.msra.mxu0 0.0
    %1612 = vmatprep.subr.mxu0 0.0
    %1613 = vmatpush2.msra.mxu0 0.0
    %1614 = vmatprep.subr.mxu0 0.0
    %1615 = vmatpush2.msra.mxu0 0.0
    %1616 = vmatprep.subr.mxu0 0.0
    %1617 = vmatpush2.msra.mxu0 0.0
    %1618 = vmatprep.mubr.f32.mxu0 0.0
    %1619 = vmatmul.mubr.f32.gmra.mxu0 %v1552
    %v1620 = vpop.f32.mrf.mxu0
    %v1621 = vadd.f32 0.0, %v1620
    %v1622 = vpop.f32.mrf.mxu0
    %1623 = vdwg.mxu0
    %v1624 = vadd.f32 %v1130, %v1621
    %v1625 = vxor.u32 %v1624, 2147483648
    %v1626 = vmul.f32 %v1625, 1.442695
    %v1627 = vpow.pop %v1626
    %v1628 = vadd.f32 %v1627, 1.0
    %v1629 = vrcp.pop %v1628
    %v1630 = vmul.f32 1.0, %v1629
    %v1631 = vtanh.pop %v1624
    %v1633 = vrot.slane %v1541, 6
    %v1635 = vmul.f32 %v1630, %v1633
    %1637 = vrot.lane.b32.xlu0 %v1631, 64
    %v1638 = vpop.permute.xlu0 %1637
    %v1640 = vmul.f32 %v1630, %v1638
    %1642 = vrot.lane.b32.xlu0 %v1640, 32
    %v1643 = vpop.permute.xlu0 %1642
    %v1645 = vadd.f32 %v1635, %v1643
    %v1646 = vtanh.pop %v1645
    %1648 = vrot.lane.b32.xlu0 %v1646, 64
    %v1649 = vpop.permute.xlu0 %1648
    %v1651 = vmul.f32 %v1630, %v1649
    %1653 = vrot.lane.b32.xlu0 %v1651, 32
    %v1654 = vpop.permute.xlu0 %1653
    %v1655 = vsel %vm159, %v1654, 0
    %1657 = vmatprep.subr.mxu0 0.0
    %1658 = vmatpush1.msra.mxu0 0.0
    %1659 = vmatprep.subr.mxu0 0.0
    %1660 = vmatpush1.msra.mxu0 0.0
    %1661 = vmatprep.subr.mxu0 0.0
    %1662 = vmatpush1.msra.mxu0 0.0
    %1663 = vmatprep.subr.mxu0 0.0
    %1664 = vmatpush1.msra.mxu0 0.0
    %1665 = vmatprep.subr.mxu0 0.0
    %1666 = vmatpush1.msra.mxu0 0.0
    %1667 = vmatprep.subr.mxu0 0.0
    %1668 = vmatpush1.msra.mxu0 0.0
    %1669 = vmatprep.subr.mxu0 0.0
    %1670 = vmatpush1.msra.mxu0 0.0
    %1671 = vmatprep.subr.mxu0 0.0
    %1672 = vmatpush1.msra.mxu0 0.0
    %1673 = vmatprep.subr.mxu0 0.0
    %1674 = vmatpush1.msra.mxu0 0.0
    %1675 = vmatprep.subr.mxu0 0.0
    %1676 = vmatpush1.msra.mxu0 0.0
    %1677 = vmatprep.subr.mxu0 0.0
    %1678 = vmatpush1.msra.mxu0 0.0
    %1679 = vmatprep.subr.mxu0 0.0
    %1680 = vmatpush1.msra.mxu0 0.0
    %1681 = vmatprep.subr.mxu0 0.0
    %1682 = vmatpush1.msra.mxu0 %v1044
    %1683 = vmatprep.subr.mxu0 0.0
    %1684 = vmatpush1.msra.mxu0 %v1043
    %1685 = vmatprep.subr.mxu0 0.0
    %1686 = vmatpush1.msra.mxu0 %v1042
    %1687 = vmatprep.subr.mxu0 0.0
    %1688 = vmatpush1.msra.mxu0 %v1041
    %1689 = vmatprep.subr.mxu0 0.0
    %1690 = vmatpush2.msra.mxu0 0.0
    %1691 = vmatprep.subr.mxu0 0.0
    %1692 = vmatpush2.msra.mxu0 0.0
    %1693 = vmatprep.subr.mxu0 0.0
    %1694 = vmatpush2.msra.mxu0 0.0
    %1695 = vmatprep.subr.mxu0 0.0
    %1696 = vmatpush2.msra.mxu0 0.0
    %1697 = vmatprep.subr.mxu0 0.0
    %1698 = vmatpush2.msra.mxu0 0.0
    %1699 = vmatprep.subr.mxu0 0.0
    %1700 = vmatpush2.msra.mxu0 0.0
    %1701 = vmatprep.subr.mxu0 0.0
    %1702 = vmatpush2.msra.mxu0 0.0
    %1703 = vmatprep.subr.mxu0 0.0
    %1704 = vmatpush2.msra.mxu0 0.0
    %1705 = vmatprep.subr.mxu0 0.0
    %1706 = vmatpush2.msra.mxu0 0.0
    %1707 = vmatprep.subr.mxu0 0.0
    %1708 = vmatpush2.msra.mxu0 0.0
    %1709 = vmatprep.subr.mxu0 0.0
    %1710 = vmatpush2.msra.mxu0 0.0
    %1711 = vmatprep.subr.mxu0 0.0
    %1712 = vmatpush2.msra.mxu0 0.0
    %1713 = vmatprep.subr.mxu0 0.0
    %1714 = vmatpush2.msra.mxu0 0.0
    %1715 = vmatprep.subr.mxu0 0.0
    %1716 = vmatpush2.msra.mxu0 0.0
    %1717 = vmatprep.subr.mxu0 0.0
    %1718 = vmatpush2.msra.mxu0 0.0
    %1719 = vmatprep.subr.mxu0 0.0
    %1720 = vmatpush2.msra.mxu0 0.0
    %1721 = vmatprep.mubr.f32.mxu0 0.0
    %1722 = vmatmul.mubr.f32.gmra.mxu0 %v1655
    %v1723 = vpop.f32.mrf.mxu0
    %v1724 = vadd.f32 0.0, %v1723
    %v1725 = vpop.f32.mrf.mxu0
    %1726 = vdwg.mxu0
    %v1728 = vrot.slane %v1724, 6
    %v1730 = vadd.f32 %v1130, %v1728
    %v1731 = vxor.u32 %v1730, 2147483648
    %v1732 = vmul.f32 %v1731, 1.442695
    %v1733 = vpow.pop %v1732
    %v1734 = vadd.f32 %v1733, 1.0
    %v1735 = vrcp.pop %v1734
    %v1736 = vmul.f32 1.0, %v1735
    %v1737 = vtanh.pop %v1730
    %v1739 = vrot.slane %v1645, 6
    %v1741 = vmul.f32 %v1736, %v1739
    %1743 = vrot.lane.b32.xlu0 %v1737, 64
    %v1744 = vpop.permute.xlu0 %1743
    %v1746 = vmul.f32 %v1736, %v1744
    %1748 = vrot.lane.b32.xlu0 %v1746, 32
    %v1749 = vpop.permute.xlu0 %1748
    %v1751 = vadd.f32 %v1741, %v1749
    %v1752 = vtanh.pop %v1751
    %1754 = vrot.lane.b32.xlu0 %v1752, 64
    %v1755 = vpop.permute.xlu0 %1754
    %v1757 = vmul.f32 %v1736, %v1755
    %v1759 = vrot.slane %v1757, 2
    %1760 = vrot.lane.b32.xlu0 %v1759, 32
    %v1761 = vpop.permute.xlu0 %1760
    %v1762 = vsel %vm159, %v1761, 0
    %1764 = vmatprep.subr.mxu0 0.0
    %1765 = vmatpush1.msra.mxu0 0.0
    %1766 = vmatprep.subr.mxu0 0.0
    %1767 = vmatpush1.msra.mxu0 0.0
    %1768 = vmatprep.subr.mxu0 0.0
    %1769 = vmatpush1.msra.mxu0 0.0
    %1770 = vmatprep.subr.mxu0 0.0
    %1771 = vmatpush1.msra.mxu0 0.0
    %1772 = vmatprep.subr.mxu0 0.0
    %1773 = vmatpush1.msra.mxu0 0.0
    %1774 = vmatprep.subr.mxu0 0.0
    %1775 = vmatpush1.msra.mxu0 0.0
    %1776 = vmatprep.subr.mxu0 0.0
    %1777 = vmatpush1.msra.mxu0 0.0
    %1778 = vmatprep.subr.mxu0 0.0
    %1779 = vmatpush1.msra.mxu0 0.0
    %1780 = vmatprep.subr.mxu0 0.0
    %1781 = vmatpush1.msra.mxu0 0.0
    %1782 = vmatprep.subr.mxu0 0.0
    %1783 = vmatpush1.msra.mxu0 0.0
    %1784 = vmatprep.subr.mxu0 0.0
    %1785 = vmatpush1.msra.mxu0 0.0
    %1786 = vmatprep.subr.mxu0 0.0
    %1787 = vmatpush1.msra.mxu0 0.0
    %1788 = vmatprep.subr.mxu0 0.0
    %1789 = vmatpush1.msra.mxu0 %v1044
    %1790 = vmatprep.subr.mxu0 0.0
    %1791 = vmatpush1.msra.mxu0 %v1043
    %1792 = vmatprep.subr.mxu0 0.0
    %1793 = vmatpush1.msra.mxu0 %v1042
    %1794 = vmatprep.subr.mxu0 0.0
    %1795 = vmatpush1.msra.mxu0 %v1041
    %1796 = vmatprep.subr.mxu0 0.0
    %1797 = vmatpush2.msra.mxu0 0.0
    %1798 = vmatprep.subr.mxu0 0.0
    %1799 = vmatpush2.msra.mxu0 0.0
    %1800 = vmatprep.subr.mxu0 0.0
    %1801 = vmatpush2.msra.mxu0 0.0
    %1802 = vmatprep.subr.mxu0 0.0
    %1803 = vmatpush2.msra.mxu0 0.0
    %1804 = vmatprep.subr.mxu0 0.0
    %1805 = vmatpush2.msra.mxu0 0.0
    %1806 = vmatprep.subr.mxu0 0.0
    %1807 = vmatpush2.msra.mxu0 0.0
    %1808 = vmatprep.subr.mxu0 0.0
    %1809 = vmatpush2.msra.mxu0 0.0
    %1810 = vmatprep.subr.mxu0 0.0
    %1811 = vmatpush2.msra.mxu0 0.0
    %1812 = vmatprep.subr.mxu0 0.0
    %1813 = vmatpush2.msra.mxu0 0.0
    %1814 = vmatprep.subr.mxu0 0.0
    %1815 = vmatpush2.msra.mxu0 0.0
    %1816 = vmatprep.subr.mxu0 0.0
    %1817 = vmatpush2.msra.mxu0 0.0
    %1818 = vmatprep.subr.mxu0 0.0
    %1819 = vmatpush2.msra.mxu0 0.0
    %1820 = vmatprep.subr.mxu0 0.0
    %1821 = vmatpush2.msra.mxu0 0.0
    %1822 = vmatprep.subr.mxu0 0.0
    %1823 = vmatpush2.msra.mxu0 0.0
    %1824 = vmatprep.subr.mxu0 0.0
    %1825 = vmatpush2.msra.mxu0 0.0
    %1826 = vmatprep.subr.mxu0 0.0
    %1827 = vmatpush2.msra.mxu0 0.0
    %1828 = vmatprep.mubr.f32.mxu0 0.0
    %1829 = vmatmul.mubr.f32.gmra.mxu0 %v1762
    %v1830 = vpop.f32.mrf.mxu0
    %v1831 = vadd.f32 0.0, %v1830
    %v1832 = vpop.f32.mrf.mxu0
    %1833 = vdwg.mxu0
    %v1835 = vrot.slane %v1831, 4
    %v1837 = vadd.f32 %v1130, %v1835
    %v1838 = vxor.u32 %v1837, 2147483648
    %v1839 = vmul.f32 %v1838, 1.442695
    %v1840 = vpow.pop %v1839
    %v1841 = vadd.f32 %v1840, 1.0
    %v1842 = vrcp.pop %v1841
    %v1843 = vmul.f32 1.0, %v1842
    %v1844 = vtanh.pop %v1837
    %v1846 = vrot.slane %v1751, 6
    %v1848 = vmul.f32 %v1843, %v1846
    %1850 = vrot.lane.b32.xlu0 %v1844, 64
    %v1851 = vpop.permute.xlu0 %1850
    %v1853 = vmul.f32 %v1843, %v1851
    %1855 = vrot.lane.b32.xlu0 %v1853, 32
    %v1856 = vpop.permute.xlu0 %1855
    %v1858 = vadd.f32 %v1848, %v1856
    %v1859 = vtanh.pop %v1858
    %1861 = vrot.lane.b32.xlu0 %v1859, 64
    %v1862 = vpop.permute.xlu0 %1861
    %v1864 = vmul.f32 %v1843, %v1862
    %v1866 = vrot.slane %v1864, 4
    %1867 = vrot.lane.b32.xlu0 %v1866, 32
    %v1868 = vpop.permute.xlu0 %1867
    %v1869 = vsel %vm159, %v1868, 0
    %1871 = vmatprep.subr.mxu0 0.0
    %1872 = vmatpush1.msra.mxu0 0.0
    %1873 = vmatprep.subr.mxu0 0.0
    %1874 = vmatpush1.msra.mxu0 0.0
    %1875 = vmatprep.subr.mxu0 0.0
    %1876 = vmatpush1.msra.mxu0 0.0
    %1877 = vmatprep.subr.mxu0 0.0
    %1878 = vmatpush1.msra.mxu0 0.0
    %1879 = vmatprep.subr.mxu0 0.0
    %1880 = vmatpush1.msra.mxu0 0.0
    %1881 = vmatprep.subr.mxu0 0.0
    %1882 = vmatpush1.msra.mxu0 0.0
    %1883 = vmatprep.subr.mxu0 0.0
    %1884 = vmatpush1.msra.mxu0 0.0
    %1885 = vmatprep.subr.mxu0 0.0
    %1886 = vmatpush1.msra.mxu0 0.0
    %1887 = vmatprep.subr.mxu0 0.0
    %1888 = vmatpush1.msra.mxu0 0.0
    %1889 = vmatprep.subr.mxu0 0.0
    %1890 = vmatpush1.msra.mxu0 0.0
    %1891 = vmatprep.subr.mxu0 0.0
    %1892 = vmatpush1.msra.mxu0 0.0
    %1893 = vmatprep.subr.mxu0 0.0
    %1894 = vmatpush1.msra.mxu0 0.0
    %1895 = vmatprep.subr.mxu0 0.0
    %1896 = vmatpush1.msra.mxu0 %v1044
    %1897 = vmatprep.subr.mxu0 0.0
    %1898 = vmatpush1.msra.mxu0 %v1043
    %1899 = vmatprep.subr.mxu0 0.0
    %1900 = vmatpush1.msra.mxu0 %v1042
    %1901 = vmatprep.subr.mxu0 0.0
    %1902 = vmatpush1.msra.mxu0 %v1041
    %1903 = vmatprep.subr.mxu0 0.0
    %1904 = vmatpush2.msra.mxu0 0.0
    %1905 = vmatprep.subr.mxu0 0.0
    %1906 = vmatpush2.msra.mxu0 0.0
    %1907 = vmatprep.subr.mxu0 0.0
    %1908 = vmatpush2.msra.mxu0 0.0
    %1909 = vmatprep.subr.mxu0 0.0
    %1910 = vmatpush2.msra.mxu0 0.0
    %1911 = vmatprep.subr.mxu0 0.0
    %1912 = vmatpush2.msra.mxu0 0.0
    %1913 = vmatprep.subr.mxu0 0.0
    %1914 = vmatpush2.msra.mxu0 0.0
    %1915 = vmatprep.subr.mxu0 0.0
    %1916 = vmatpush2.msra.mxu0 0.0
    %1917 = vmatprep.subr.mxu0 0.0
    %1918 = vmatpush2.msra.mxu0 0.0
    %1919 = vmatprep.subr.mxu0 0.0
    %1920 = vmatpush2.msra.mxu0 0.0
    %1921 = vmatprep.subr.mxu0 0.0
    %1922 = vmatpush2.msra.mxu0 0.0
    %1923 = vmatprep.subr.mxu0 0.0
    %1924 = vmatpush2.msra.mxu0 0.0
    %1925 = vmatprep.subr.mxu0 0.0
    %1926 = vmatpush2.msra.mxu0 0.0
    %1927 = vmatprep.subr.mxu0 0.0
    %1928 = vmatpush2.msra.mxu0 0.0
    %1929 = vmatprep.subr.mxu0 0.0
    %1930 = vmatpush2.msra.mxu0 0.0
    %1931 = vmatprep.subr.mxu0 0.0
    %1932 = vmatpush2.msra.mxu0 0.0
    %1933 = vmatprep.subr.mxu0 0.0
    %1934 = vmatpush2.msra.mxu0 0.0
    %1935 = vmatprep.mubr.f32.mxu0 0.0
    %1936 = vmatmul.mubr.f32.gmra.mxu0 %v1869
    %v1937 = vpop.f32.mrf.mxu0
    %v1938 = vadd.f32 0.0, %v1937
    %v1939 = vpop.f32.mrf.mxu0
    %1940 = vdwg.mxu0
    %v1942 = vrot.slane %v1938, 2
    %v1944 = vadd.f32 %v1130, %v1942
    %v1945 = vxor.u32 %v1944, 2147483648
    %v1946 = vmul.f32 %v1945, 1.442695
    %v1947 = vpow.pop %v1946
    %v1948 = vadd.f32 %v1947, 1.0
    %v1949 = vrcp.pop %v1948
    %v1950 = vmul.f32 1.0, %v1949
    %v1951 = vtanh.pop %v1944
    %v1953 = vrot.slane %v1858, 6
    %v1955 = vmul.f32 %v1950, %v1953
    %1957 = vrot.lane.b32.xlu0 %v1951, 64
    %v1958 = vpop.permute.xlu0 %1957
    %v1960 = vmul.f32 %v1950, %v1958
    %1962 = vrot.lane.b32.xlu0 %v1960, 32
    %v1963 = vpop.permute.xlu0 %1962
    %v1965 = vadd.f32 %v1955, %v1963
    %v1966 = vtanh.pop %v1965
    %1968 = vrot.lane.b32.xlu0 %v1966, 64
    %v1969 = vpop.permute.xlu0 %1968
    %v1971 = vmul.f32 %v1950, %v1969
    %v1972 = vld [vmem:[%s7] sm:$0xff]
    %v1973 = vld [vmem:[%s7 + $0x8] sm:$0xff]
    %v1974 = vld [vmem:[%s7 + $0x10] sm:$0xff]
    %v1975 = vld [vmem:[%s7 + $0x18] sm:$0xff]
    %v1976 = vld [vmem:[#allocation3] sm:$0x1]
    %v1978 = vlaneseq
    %v1979 = vshrl.u32 %v1978, 7
    %v1980 = vsub.s32 0, %v1979
    %v1981 = vrot.slane %v1976, %v1980
    %v1984 = vrot.slane %v1971, 6
    %1985 = vrot.lane.b32.xlu0 %v1984, 32
    %v1986 = vpop.permute.xlu0 %1985
    %v1987 = vsel %vm159, %v1986, 0
    %1989 = vmatprep.subr.mxu0 0.0
    %1990 = vmatpush1.msra.mxu0 0.0
    %1991 = vmatprep.subr.mxu0 0.0
    %1992 = vmatpush1.msra.mxu0 0.0
    %1993 = vmatprep.subr.mxu0 0.0
    %1994 = vmatpush1.msra.mxu0 0.0
    %1995 = vmatprep.subr.mxu0 0.0
    %1996 = vmatpush1.msra.mxu0 0.0
    %1997 = vmatprep.subr.mxu0 0.0
    %1998 = vmatpush1.msra.mxu0 0.0
    %1999 = vmatprep.subr.mxu0 0.0
    %2000 = vmatpush1.msra.mxu0 0.0
    %2001 = vmatprep.subr.mxu0 0.0
    %2002 = vmatpush1.msra.mxu0 0.0
    %2003 = vmatprep.subr.mxu0 0.0
    %2004 = vmatpush1.msra.mxu0 0.0
    %2005 = vmatprep.subr.mxu0 0.0
    %2006 = vmatpush1.msra.mxu0 0.0
    %2007 = vmatprep.subr.mxu0 0.0
    %2008 = vmatpush1.msra.mxu0 0.0
    %2009 = vmatprep.subr.mxu0 0.0
    %2010 = vmatpush1.msra.mxu0 0.0
    %2011 = vmatprep.subr.mxu0 0.0
    %2012 = vmatpush1.msra.mxu0 0.0
    %2013 = vmatprep.subr.mxu0 0.0
    %2014 = vmatpush1.msra.mxu0 %v1975
    %2015 = vmatprep.subr.mxu0 0.0
    %2016 = vmatpush1.msra.mxu0 %v1974
    %2017 = vmatprep.subr.mxu0 0.0
    %2018 = vmatpush1.msra.mxu0 %v1973
    %2019 = vmatprep.subr.mxu0 0.0
    %2020 = vmatpush1.msra.mxu0 %v1972
    %2021 = vmatprep.subr.mxu0 0.0
    %2022 = vmatpush2.msra.mxu0 0.0
    %2023 = vmatprep.subr.mxu0 0.0
    %2024 = vmatpush2.msra.mxu0 0.0
    %2025 = vmatprep.subr.mxu0 0.0
    %2026 = vmatpush2.msra.mxu0 0.0
    %2027 = vmatprep.subr.mxu0 0.0
    %2028 = vmatpush2.msra.mxu0 0.0
    %2029 = vmatprep.subr.mxu0 0.0
    %2030 = vmatpush2.msra.mxu0 0.0
    %2031 = vmatprep.subr.mxu0 0.0
    %2032 = vmatpush2.msra.mxu0 0.0
    %2033 = vmatprep.subr.mxu0 0.0
    %2034 = vmatpush2.msra.mxu0 0.0
    %2035 = vmatprep.subr.mxu0 0.0
    %2036 = vmatpush2.msra.mxu0 0.0
    %2037 = vmatprep.subr.mxu0 0.0
    %2038 = vmatpush2.msra.mxu0 0.0
    %2039 = vmatprep.subr.mxu0 0.0
    %2040 = vmatpush2.msra.mxu0 0.0
    %2041 = vmatprep.subr.mxu0 0.0
    %2042 = vmatpush2.msra.mxu0 0.0
    %2043 = vmatprep.subr.mxu0 0.0
    %2044 = vmatpush2.msra.mxu0 0.0
    %2045 = vmatprep.subr.mxu0 0.0
    %2046 = vmatpush2.msra.mxu0 0.0
    %2047 = vmatprep.subr.mxu0 0.0
    %2048 = vmatpush2.msra.mxu0 0.0
    %2049 = vmatprep.subr.mxu0 0.0
    %2050 = vmatpush2.msra.mxu0 0.0
    %2051 = vmatprep.subr.mxu0 0.0
    %2052 = vmatpush2.msra.mxu0 0.0
    %2053 = vmatprep.mubr.f32.mxu0 0.0
    %2054 = vmatmul.mubr.f32.gmra.mxu0 %v1987
    %v2055 = vpop.f32.mrf.mxu0
    %v2056 = vadd.f32 %v1981, %v2055
    %v2057 = vpop.f32.mrf.mxu0
    %2058 = vdwg.mxu0
    %vm2059 = vcmask 1024
    %2060 = vst.msk [vmem:[%s9] sm:$0x3] %vm2059, %v2056
    // Predicated region
    $region46: #{lstm_forward.1} parent=1 // pred_check
      _
    $region47: #{lstm_forward.1} parent=1 // pred_check_branch
      %2062 = sbr.rel (0) target = $region49
    $region48: #{lstm_forward.1} parent=1 // pred_region
      _
    $region49: #{lstm_forward.1} parent=1 // pred_fallthru
      _
    // Predicated region
    $region50: #{lstm_forward.1} parent=1 // pred_check
      _
    $region51: #{lstm_forward.1} parent=1 // pred_check_branch
      %2064 = sbr.rel (0) target = $region53
    $region52: #{lstm_forward.1} parent=1 // pred_region
      _
    $region53: #{lstm_forward.1} parent=1 // pred_fallthru
      _
    %2065 = vsyncpa [#allocation5], 1
    %2066 = vsyncpa [#allocation7], 1

</llo_original>
